<compile_context>
chip_gen: v7x
topology: tpu7x:2x2x1
jax: 0.10.0
libtpu: 0.0.40
codegen_flags: <defaults>
</compile_context>

<pallas_src>
import functools

import jax
import jax.numpy as jnp
from jax.experimental import pallas as pl
from jax.experimental.pallas import tpu as pltpu

LN_EPS = 1e-5  # PyTorch nn.LayerNorm default eps


def _sum_all(a):
    """Full reduction to (1, 1) via two single-axis reduces (robust lowering)."""
    return jnp.sum(jnp.sum(a, axis=1, keepdims=True), axis=0, keepdims=True)


# ---------------------------------------------------------------------------
# Fused kernel: 3-layer projector MLP + blocked covariance/variance statistics
# ---------------------------------------------------------------------------
def fused_projection_kernel(
    x_ref, w1_ref, b1_ref, g1_ref, be1_ref,
    w2_ref, b2_ref, g2_ref, be2_ref,
    w3_ref, b3_ref,
    cov_ref, std_ref, scal_ref,
    gram_acc, sum_acc, pnorm_acc, xnorm_acc,
    *, n_total, tm, d, gamma, eps, cov_div, vis, needs_mask, compute_dtype):
    step = pl.program_id(0)

    @pl.when(step == 0)
    def _init():
        gram_acc[...] = jnp.zeros_like(gram_acc)
        sum_acc[...] = jnp.zeros_like(sum_acc)
        pnorm_acc[...] = jnp.zeros_like(pnorm_acc)
        xnorm_acc[...] = jnp.zeros_like(xnorm_acc)

    def layernorm(h, g, b):
        mu = jnp.mean(h, axis=-1, keepdims=True)
        var = jnp.mean((h - mu) ** 2, axis=-1, keepdims=True)  # biased, like torch LN
        return (h - mu) * jax.lax.rsqrt(var + LN_EPS) * g + b

    # ---- projector MLP on this row tile (resident in VMEM/vregs) ----
    # MXU matmuls run in compute_dtype; accumulation + LayerNorm stay f32.
    x_in = x_ref[...]
    h = jnp.dot(x_in.astype(compute_dtype), w1_ref[...],
                preferred_element_type=jnp.float32) + b1_ref[...]
    h = jnp.maximum(layernorm(h, g1_ref[...], be1_ref[...]), 0.0)
    h = jnp.dot(h.astype(compute_dtype), w2_ref[...],
                preferred_element_type=jnp.float32) + b2_ref[...]
    h = jnp.maximum(layernorm(h, g2_ref[...], be2_ref[...]), 0.0)
    p = jnp.dot(h.astype(compute_dtype), w3_ref[...],
                preferred_element_type=jnp.float32) + b3_ref[...]       # (tm, D) f32

    # ---- mask padded rows (ragged-N tail) ----
    if needs_mask:
        row = step * tm + jax.lax.broadcasted_iota(jnp.int32, (tm, 1), 0)
        valid = (row < n_total).astype(jnp.float32)                     # (tm, 1)
        p = p * valid

    # ---- blocked statistics: Gram(p) on MXU, feature sums on VPU/XLU ----
    gram_acc[...] += jax.lax.dot_general(
        p, p, (((0,), (0,)), ((), ())), preferred_element_type=jnp.float32)  # (D, D)
    sum_acc[...] += jnp.sum(p, axis=0, keepdims=True)                         # (1, D)

    if vis:
        pn = jnp.sqrt(jnp.sum(p * p, axis=1, keepdims=True))            # (tm, 1)
        xf = x_in.astype(jnp.float32)
        xn = jnp.sqrt(jnp.sum(xf * xf, axis=1, keepdims=True))
        if needs_mask:
            xn = xn * valid                                              # p already masked
        pnorm_acc[...] += _sum_all(pn)
        xnorm_acc[...] += _sum_all(xn)

    # ---- finalize on the last row tile ----
    @pl.when(step == pl.num_programs(0) - 1)
    def _finalize():
        n = float(n_total)
        inv_n = 1.0 / n
        denom = 1.0 / max(n - 1.0, 1.0)   # guard n == 1

        gram = gram_acc[...]                                             # (D, D)
        s = sum_acc[...]                                                 # (1, D)
        # outer(s, s): contract the length-1 axis -> (D, D) mean correction
        outer = jax.lax.dot_general(
            s, s, (((0,), (0,)), ((), ())), preferred_element_type=jnp.float32)

        cov = (gram - outer * inv_n) * denom                             # (D, D)

        ri = jax.lax.broadcasted_iota(jnp.int32, (d, d), 0)
        ci = jax.lax.broadcasted_iota(jnp.int32, (d, d), 1)
        eye = ri == ci
        # var == diag(cov) bit-exact (same values, same arithmetic path)
        var = jnp.sum(jnp.where(eye, cov, 0.0), axis=0, keepdims=True)   # (1, D)
        std = jnp.sqrt(var + eps)

        std_loss = jnp.mean(jnp.maximum(gamma - std, 0.0), axis=1, keepdims=True)
        cov_off = jnp.where(eye, 0.0, cov)
        cov_loss = _sum_all(cov_off * cov_off) * (1.0 / cov_div)
        mean = s * inv_n
        proj_mean = _sum_all(mean) * (1.0 / d)

        # pack scalars into one lane-dense (1, 128) output vector
        lane = jax.lax.broadcasted_iota(jnp.int32, (1, 128), 1)
        svec = jnp.where(lane == 0, std_loss, 0.0)
        svec = svec + jnp.where(lane == 1, cov_loss, 0.0)
        svec = svec + jnp.where(lane == 2, proj_mean, 0.0)
        if vis:
            p_out = pnorm_acc[...] * inv_n
            p_in = xnorm_acc[...] * inv_n
            svec = svec + jnp.where(lane == 3, p_out, 0.0)
            svec = svec + jnp.where(lane == 4, p_in, 0.0)
            svec = svec + jnp.where(lane == 5, p_out - p_in, 0.0)

        cov_ref[...] = cov
        std_ref[...] = std
        scal_ref[...] = svec


# ---------------------------------------------------------------------------
# Wrapper
# ---------------------------------------------------------------------------
def _round_up(x, m):
    return ((x + m - 1) // m) * m


def _pick_row_tile(n, h, itemsize, sublane, target_tile_bytes):
    """Row tile sized by bytes (~target_tile_bytes of x per step), sublane-aligned."""
    rows = max(sublane, (target_tile_bytes // max(1, h * itemsize)) // sublane * sublane)
    return min(rows, _round_up(n, sublane))


def projection_head_forward(x, params, *, gamma, eps, cov_div, vis_step=False,
                            compute_dtype=jnp.float32, cast_input=False,
                            target_tile_bytes=2 << 20):
    B, S, H = x.shape
    D = params["w1"].shape[1]
    N = B * S

    x_flat = x.reshape(N, H)
    if cast_input:
        x_flat = x_flat.astype(compute_dtype)   # halves x DMA bytes when bf16
    itemsize = jnp.dtype(x_flat.dtype).itemsize
    sublane = max(8, 32 // itemsize)            # 8 for f32, 16 for bf16

    tm = _pick_row_tile(N, H, itemsize, sublane, target_tile_bytes)
    grid_n = pl.cdiv(N, tm)
    n_pad = grid_n * tm
    needs_mask = n_pad != N
    if needs_mask:
        x_flat = jnp.pad(x_flat, ((0, n_pad - N), (0, 0)))

    # MXU operands in compute_dtype; biases / LayerNorm params stay f32.
    w1 = params["w1"].astype(compute_dtype)
    w2 = params["w2"].astype(compute_dtype)
    w3 = params["w3"].astype(compute_dtype)

    kernel = functools.partial(
        fused_projection_kernel,
        n_total=N, tm=tm, d=D, gamma=float(gamma), eps=float(eps),
        cov_div=float(cov_div), vis=bool(vis_step), needs_mask=bool(needs_mask),
        compute_dtype=compute_dtype)

    def full(shape):
        # Grid-invariant blocks (weights / biases / LN params): constant index map.
        return pl.BlockSpec(shape, lambda i: (0,) * len(shape))

    cov, std, scalars = pl.pallas_call(
        kernel,
        out_shape=(
            jax.ShapeDtypeStruct((D, D), jnp.float32),    # cov_mx
            jax.ShapeDtypeStruct((1, D), jnp.float32),    # std_vec
            jax.ShapeDtypeStruct((1, 128), jnp.float32),  # packed scalar results
        ),
        grid=(grid_n,),
        in_specs=[
            pl.BlockSpec((tm, H), lambda i: (i, 0)),      # x row tile (pipelined)
            full((H, D)), full((1, D)), full((1, D)), full((1, D)),   # layer 1 + LN1
            full((D, D)), full((1, D)), full((1, D)), full((1, D)),   # layer 2 + LN2
            full((D, D)), full((1, D)),                               # layer 3
        ],
        out_specs=(
            full((D, D)), full((1, D)), full((1, 128)),
        ),
        scratch_shapes=[
            pltpu.VMEM((D, D), jnp.float32),   # Gram accumulator
            pltpu.VMEM((1, D), jnp.float32),   # per-feature sums
            pltpu.VMEM((1, 1), jnp.float32),   # sum of ||proj|| row norms (vis)
            pltpu.VMEM((1, 1), jnp.float32),   # sum of ||x|| row norms (vis)
        ],
        compiler_params=pltpu.CompilerParams(
            dimension_semantics=("arbitrary",),
            vmem_limit_bytes=48 * 1024 * 1024),
    )(x_flat,
      w1, params["b1"], params["g1"], params["be1"],
      w2, params["b2"], params["g2"], params["be2"],
      w3, params["b3"])

    out = {
        "std_loss": scalars[0, 0],
        "cov_loss": scalars[0, 1],
        "proj_mean": scalars[0, 2],
        "proj_batch_sz": N,
        "cov_mx": cov,
        "std_vec": std.reshape(D),
    }
    if vis_step:
        out["proj_out_norm"] = scalars[0, 3]
        out["proj_input_norm"] = scalars[0, 4]
        out["proj_diff_norm"] = scalars[0, 5]
    return out


# ---------------------------------------------------------------------------
# Pure-JAX reference (correctness sanity check)
# ---------------------------------------------------------------------------
def reference_forward(x, params, *, gamma, eps, cov_div):
    def ln(h, g, b):
        mu = h.mean(-1, keepdims=True)
        var = ((h - mu) ** 2).mean(-1, keepdims=True)
        return (h - mu) / jnp.sqrt(var + LN_EPS) * g + b

    B, S, H = x.shape
    xf = x.reshape(B * S, H).astype(jnp.float32)
    h = jnp.maximum(ln(xf @ params["w1"] + params["b1"], params["g1"], params["be1"]), 0.0)
    h = jnp.maximum(ln(h @ params["w2"] + params["b2"], params["g2"], params["be2"]), 0.0)
    proj = h @ params["w3"] + params["b3"]
    n = proj.shape[0]
    mean = proj.mean(0, keepdims=True)
    pc = proj - mean
    cov = pc.T @ pc / (n - 1)
    var = (pc ** 2).sum(0) / (n - 1)
    std = jnp.sqrt(var + eps)
    std_loss = jnp.mean(jnp.maximum(gamma - std, 0.0))
    off = cov * (1.0 - jnp.eye(cov.shape[0]))
    cov_loss = jnp.sum(off ** 2) / cov_div
    pvn = jnp.sqrt((proj ** 2).sum(-1))
    xvn = jnp.sqrt((xf ** 2).sum(-1))
    return {
        "std_loss": std_loss, "cov_loss": cov_loss, "cov_mx": cov, "std_vec": std,
        "proj_mean": jnp.mean(mean),
        "proj_out_norm": jnp.mean(pvn),
        "proj_input_norm": jnp.mean(xvn),
        "proj_diff_norm": jnp.mean(pvn - xvn),
    }


if __name__ == "__main__":
    # opt: num_slots, hid_dim=32, proj_dim=32, std_target=1.0, epsilon=1e-4
    H = D = 32
    GAMMA, EPS = 1.0, 1e-4
    COV_DIV = float(D)  # cov_div_sq=False

    key = jax.random.PRNGKey(0)
    ks = jax.random.split(key, 8)
    params = {
        "w1": jax.random.normal(ks[0], (H, D), jnp.float32) * 0.1,
        "b1": jax.random.normal(ks[1], (1, D), jnp.float32) * 0.01,
        "g1": jnp.ones((1, D), jnp.float32),
        "be1": jnp.zeros((1, D), jnp.float32),
        "w2": jax.random.normal(ks[2], (D, D), jnp.float32) * 0.1,
        "b2": jax.random.normal(ks[3], (1, D), jnp.float32) * 0.01,
        "g2": jnp.ones((1, D), jnp.float32),
        "be2": jnp.zeros((1, D), jnp.float32),
        "w3": jax.random.normal(ks[4], (D, D), jnp.float32) * 0.1,
        "b3": jax.random.normal(ks[5], (1, D), jnp.float32) * 0.01,
    }

    # 1) Ragged N (N=35 -> padded to 40), tiny tile forces multi-step grid with
    #    masked tail; vis norms on.
    B, S = 5, 7
    x = jax.random.normal(ks[6], (B, S, H), jnp.float32)
    ref = reference_forward(x, params, gamma=GAMMA, eps=EPS, cov_div=COV_DIV)
    out = projection_head_forward(
        x, params, gamma=GAMMA, eps=EPS, cov_div=COV_DIV, vis_step=True,
        target_tile_bytes=8 * H * 4)   # -> tm=8, grid=(5,), last tile masked
    jax.block_until_ready(out["cov_mx"])

    assert jnp.allclose(out["std_loss"], ref["std_loss"], rtol=1e-3, atol=1e-4)
    assert jnp.allclose(out["cov_loss"], ref["cov_loss"], rtol=1e-3, atol=1e-4)
    assert jnp.allclose(out["cov_mx"], ref["cov_mx"], rtol=1e-3, atol=1e-4)
    assert jnp.allclose(out["std_vec"], ref["std_vec"], rtol=1e-3, atol=1e-4)
    assert jnp.allclose(out["proj_mean"], ref["proj_mean"], rtol=1e-3, atol=1e-4)
    assert jnp.allclose(out["proj_out_norm"], ref["proj_out_norm"], rtol=1e-3, atol=1e-4)
    assert jnp.allclose(out["proj_input_norm"], ref["proj_input_norm"], rtol=1e-3, atol=1e-4)
    assert jnp.allclose(out["proj_diff_norm"], ref["proj_diff_norm"], rtol=1e-3, atol=1e-3)

    # 2) Aligned N (N=32), default byte-sized tile -> single block, no vis.
    B2, S2 = 4, 8
    x2 = jax.random.normal(ks[7], (B2, S2, H), jnp.float32)
    ref2 = reference_forward(x2, params, gamma=GAMMA, eps=EPS, cov_div=COV_DIV)
    out2 = projection_head_forward(
        x2, params, gamma=GAMMA, eps=EPS, cov_div=COV_DIV, vis_step=False)
    jax.block_until_ready(out2["cov_mx"])
    assert jnp.allclose(out2["std_loss"], ref2["std_loss"], rtol=1e-3, atol=1e-4)
    assert jnp.allclose(out2["cov_loss"], ref2["cov_loss"], rtol=1e-3, atol=1e-4)
    assert jnp.allclose(out2["cov_mx"], ref2["cov_mx"], rtol=1e-3, atol=1e-4)

    # 3) bf16 MXU-feed path (weights + x in bf16, f32 accumulation) — smoke test.
    out3 = projection_head_forward(
        x2, params, gamma=GAMMA, eps=EPS, cov_div=COV_DIV, vis_step=False,
        compute_dtype=jnp.bfloat16, cast_input=True)
    jax.block_until_ready(out3["cov_mx"])
    assert bool(jnp.isfinite(out3["std_loss"])) and bool(jnp.isfinite(out3["cov_loss"]))
    assert jnp.allclose(out3["std_loss"], ref2["std_loss"], rtol=5e-2, atol=5e-2)

    print("KERNEL_OK")
</pallas_src>

<mosaic_0001>
module attributes {stable_mosaic.version = 11 : i64} {
  func.func @fused_projection_kernel(%arg0: i32, %arg1: memref<8x32xf32, #tpu.memory_space<vmem>>, %arg2: memref<32x32xf32, #tpu.memory_space<vmem>>, %arg3: memref<1x32xf32, #tpu.memory_space<vmem>>, %arg4: memref<1x32xf32, #tpu.memory_space<vmem>>, %arg5: memref<1x32xf32, #tpu.memory_space<vmem>>, %arg6: memref<32x32xf32, #tpu.memory_space<vmem>>, %arg7: memref<1x32xf32, #tpu.memory_space<vmem>>, %arg8: memref<1x32xf32, #tpu.memory_space<vmem>>, %arg9: memref<1x32xf32, #tpu.memory_space<vmem>>, %arg10: memref<32x32xf32, #tpu.memory_space<vmem>>, %arg11: memref<1x32xf32, #tpu.memory_space<vmem>>, %arg12: memref<32x32xf32, #tpu.memory_space<vmem>>, %arg13: memref<1x32xf32, #tpu.memory_space<vmem>>, %arg14: memref<1x128xf32, #tpu.memory_space<vmem>>, %arg15: memref<32x32xf32, #tpu.memory_space<vmem>>, %arg16: memref<1x32xf32, #tpu.memory_space<vmem>>, %arg17: memref<1x1xf32, #tpu.memory_space<vmem>>, %arg18: memref<1x1xf32, #tpu.memory_space<vmem>>) attributes {dimension_semantics = [#tpu.dimension_semantics<arbitrary>], iteration_bounds = array<i64: 5>, scalar_prefetch = 0 : i64, scratch_operands = 4 : i64, tpu.core_type = #tpu.core_type<tc>, window_params = [{transform_indices = @transform_0, window_bounds = array<i64: 8, 32>}, {pipeline_mode = #tpu.pipeline_mode<synchronous>, transform_indices = @transform_1, window_bounds = array<i64: 32, 32>}, {pipeline_mode = #tpu.pipeline_mode<synchronous>, transform_indices = @transform_2, window_bounds = array<i64: 1, 32>}, {pipeline_mode = #tpu.pipeline_mode<synchronous>, transform_indices = @transform_3, window_bounds = array<i64: 1, 32>}, {pipeline_mode = #tpu.pipeline_mode<synchronous>, transform_indices = @transform_4, window_bounds = array<i64: 1, 32>}, {pipeline_mode = #tpu.pipeline_mode<synchronous>, transform_indices = @transform_5, window_bounds = array<i64: 32, 32>}, {pipeline_mode = #tpu.pipeline_mode<synchronous>, transform_indices = @transform_6, window_bounds = array<i64: 1, 32>}, {pipeline_mode = #tpu.pipeline_mode<synchronous>, transform_indices = @transform_7, window_bounds = array<i64: 1, 32>}, {pipeline_mode = #tpu.pipeline_mode<synchronous>, transform_indices = @transform_8, window_bounds = array<i64: 1, 32>}, {pipeline_mode = #tpu.pipeline_mode<synchronous>, transform_indices = @transform_9, window_bounds = array<i64: 32, 32>}, {pipeline_mode = #tpu.pipeline_mode<synchronous>, transform_indices = @transform_10, window_bounds = array<i64: 1, 32>}, {pipeline_mode = #tpu.pipeline_mode<synchronous>, transform_indices = @transform_11, window_bounds = array<i64: 32, 32>}, {pipeline_mode = #tpu.pipeline_mode<synchronous>, transform_indices = @transform_12, window_bounds = array<i64: 1, 32>}, {pipeline_mode = #tpu.pipeline_mode<synchronous>, transform_indices = @transform_13, window_bounds = array<i64: 1, 128>}]} {
    %c0_i32 = arith.constant 0 : i32
    %0 = arith.cmpi eq, %arg0, %c0_i32 : i32
    %1 = arith.extui %0 : i1 to i32
    %c0_i32_0 = arith.constant 0 : i32
    %2 = arith.cmpi ne, %1, %c0_i32_0 : i32
    scf.if %2 {
      %cst_61 = arith.constant 0.000000e+00 : f32
      %116 = vector.broadcast %cst_61 : f32 to vector<32x32xf32>
      %c0_62 = arith.constant 0 : index
      %c0_63 = arith.constant 0 : index
      %117 = vector.load %arg15[%c0_62, %c0_63] : memref<32x32xf32, #tpu.memory_space<vmem>>, vector<32x32xf32>
      tpu.vector_store %arg15[%c0_62, %c0_63], %116 {strides = array<i32>} : memref<32x32xf32, #tpu.memory_space<vmem>>, vector<32x32xf32>,
      %cst_64 = arith.constant 0.000000e+00 : f32
      %118 = vector.broadcast %cst_64 : f32 to vector<1x32xf32>
      %c0_65 = arith.constant 0 : index
      %c0_66 = arith.constant 0 : index
      %119 = vector.load %arg16[%c0_65, %c0_66] : memref<1x32xf32, #tpu.memory_space<vmem>>, vector<1x32xf32>
      tpu.vector_store %arg16[%c0_65, %c0_66], %118 {strides = array<i32>} : memref<1x32xf32, #tpu.memory_space<vmem>>, vector<1x32xf32>,
      %cst_67 = arith.constant 0.000000e+00 : f32
      %120 = vector.broadcast %cst_67 : f32 to vector<1x1xf32>
      %c0_68 = arith.constant 0 : index
      %c0_69 = arith.constant 0 : index
      %121 = vector.load %arg17[%c0_68, %c0_69] : memref<1x1xf32, #tpu.memory_space<vmem>>, vector<1x1xf32>
      tpu.vector_store %arg17[%c0_68, %c0_69], %120 {strides = array<i32>} : memref<1x1xf32, #tpu.memory_space<vmem>>, vector<1x1xf32>,
      %cst_70 = arith.constant 0.000000e+00 : f32
      %122 = vector.broadcast %cst_70 : f32 to vector<1x1xf32>
      %c0_71 = arith.constant 0 : index
      %c0_72 = arith.constant 0 : index
      %123 = vector.load %arg18[%c0_71, %c0_72] : memref<1x1xf32, #tpu.memory_space<vmem>>, vector<1x1xf32>
      tpu.vector_store %arg18[%c0_71, %c0_72], %122 {strides = array<i32>} : memref<1x1xf32, #tpu.memory_space<vmem>>, vector<1x1xf32>,
    } else {
    }
    %c0 = arith.constant 0 : index
    %c0_1 = arith.constant 0 : index
    %3 = vector.load %arg1[%c0, %c0_1] : memref<8x32xf32, #tpu.memory_space<vmem>>, vector<8x32xf32>
    %c0_2 = arith.constant 0 : index
    %c0_3 = arith.constant 0 : index
    %4 = vector.load %arg2[%c0_2, %c0_3] : memref<32x32xf32, #tpu.memory_space<vmem>>, vector<32x32xf32>
    %cst = arith.constant dense<0.000000e+00> : vector<8x32xf32>
    %5 = tpu.matmul %3, %4, %cst {dimension_numbers = #tpu.dot_dimension_numbers<[1], [0], [0], [1], [0, 0, 1, 1], [], []>} : vector<8x32xf32>, vector<32x32xf32>, vector<8x32xf32> -> vector<8x32xf32>
    %c0_4 = arith.constant 0 : index
    %c0_5 = arith.constant 0 : index
    %6 = vector.load %arg3[%c0_4, %c0_5] : memref<1x32xf32, #tpu.memory_space<vmem>>, vector<1x32xf32>
    %7 = vector.broadcast %6 : vector<1x32xf32> to vector<8x32xf32>
    %8 = arith.addf %5, %7 : vector<8x32xf32>
    %c0_6 = arith.constant 0 : index
    %c0_7 = arith.constant 0 : index
    %9 = vector.load %arg4[%c0_6, %c0_7] : memref<1x32xf32, #tpu.memory_space<vmem>>, vector<1x32xf32>
    %c0_8 = arith.constant 0 : index
    %c0_9 = arith.constant 0 : index
    %10 = vector.load %arg5[%c0_8, %c0_9] : memref<1x32xf32, #tpu.memory_space<vmem>>, vector<1x32xf32>
    %cst_10 = arith.constant dense<0.000000e+00> : vector<8xf32>
    %11 = vector.multi_reduction <add>, %8, %cst_10 [1] : vector<8x32xf32> to vector<8xf32>
    %12 = vector.shape_cast %11 : vector<8xf32> to vector<8x1xf32>
    %cst_11 = arith.constant 3.200000e+01 : f32
    %13 = vector.broadcast %cst_11 : f32 to vector<8x1xf32>
    %14 = arith.divf %12, %13 : vector<8x1xf32>
    %15 = vector.broadcast %14 : vector<8x1xf32> to vector<8x32xf32>
    %16 = arith.subf %8, %15 : vector<8x32xf32>
    %17 = arith.mulf %16, %16 : vector<8x32xf32>
    %cst_12 = arith.constant dense<0.000000e+00> : vector<8xf32>
    %18 = vector.multi_reduction <add>, %17, %cst_12 [1] : vector<8x32xf32> to vector<8xf32>
    %19 = vector.shape_cast %18 : vector<8xf32> to vector<8x1xf32>
    %cst_13 = arith.constant 3.200000e+01 : f32
    %20 = vector.broadcast %cst_13 : f32 to vector<8x1xf32>
    %21 = arith.divf %19, %20 : vector<8x1xf32>
    %22 = vector.broadcast %14 : vector<8x1xf32> to vector<8x32xf32>
    %23 = arith.subf %8, %22 : vector<8x32xf32>
    %cst_14 = arith.constant 9.99999974E-6 : f32
    %24 = vector.broadcast %cst_14 : f32 to vector<8x1xf32>
    %25 = arith.addf %21, %24 : vector<8x1xf32>
    %26 = math.rsqrt %25 : vector<8x1xf32>
    %27 = vector.broadcast %26 : vector<8x1xf32> to vector<8x32xf32>
    %28 = arith.mulf %23, %27 : vector<8x32xf32>
    %29 = vector.broadcast %9 : vector<1x32xf32> to vector<8x32xf32>
    %30 = arith.mulf %28, %29 : vector<8x32xf32>
    %31 = vector.broadcast %10 : vector<1x32xf32> to vector<8x32xf32>
    %32 = arith.addf %30, %31 : vector<8x32xf32>
    %cst_15 = arith.constant 0.000000e+00 : f32
    %33 = vector.broadcast %cst_15 : f32 to vector<8x32xf32>
    %34 = arith.maximumf %32, %33 : vector<8x32xf32>
    %c0_16 = arith.constant 0 : index
    %c0_17 = arith.constant 0 : index
    %35 = vector.load %arg6[%c0_16, %c0_17] : memref<32x32xf32, #tpu.memory_space<vmem>>, vector<32x32xf32>
    %cst_18 = arith.constant dense<0.000000e+00> : vector<8x32xf32>
    %36 = tpu.matmul %34, %35, %cst_18 {dimension_numbers = #tpu.dot_dimension_numbers<[1], [0], [0], [1], [0, 0, 1, 1], [], []>} : vector<8x32xf32>, vector<32x32xf32>, vector<8x32xf32> -> vector<8x32xf32>
    %c0_19 = arith.constant 0 : index
    %c0_20 = arith.constant 0 : index
    %37 = vector.load %arg7[%c0_19, %c0_20] : memref<1x32xf32, #tpu.memory_space<vmem>>, vector<1x32xf32>
    %38 = vector.broadcast %37 : vector<1x32xf32> to vector<8x32xf32>
    %39 = arith.addf %36, %38 : vector<8x32xf32>
    %c0_21 = arith.constant 0 : index
    %c0_22 = arith.constant 0 : index
    %40 = vector.load %arg8[%c0_21, %c0_22] : memref<1x32xf32, #tpu.memory_space<vmem>>, vector<1x32xf32>
    %c0_23 = arith.constant 0 : index
    %c0_24 = arith.constant 0 : index
    %41 = vector.load %arg9[%c0_23, %c0_24] : memref<1x32xf32, #tpu.memory_space<vmem>>, vector<1x32xf32>
    %cst_25 = arith.constant dense<0.000000e+00> : vector<8xf32>
    %42 = vector.multi_reduction <add>, %39, %cst_25 [1] : vector<8x32xf32> to vector<8xf32>
    %43 = vector.shape_cast %42 : vector<8xf32> to vector<8x1xf32>
    %cst_26 = arith.constant 3.200000e+01 : f32
    %44 = vector.broadcast %cst_26 : f32 to vector<8x1xf32>
    %45 = arith.divf %43, %44 : vector<8x1xf32>
    %46 = vector.broadcast %45 : vector<8x1xf32> to vector<8x32xf32>
    %47 = arith.subf %39, %46 : vector<8x32xf32>
    %48 = arith.mulf %47, %47 : vector<8x32xf32>
    %cst_27 = arith.constant dense<0.000000e+00> : vector<8xf32>
    %49 = vector.multi_reduction <add>, %48, %cst_27 [1] : vector<8x32xf32> to vector<8xf32>
    %50 = vector.shape_cast %49 : vector<8xf32> to vector<8x1xf32>
    %cst_28 = arith.constant 3.200000e+01 : f32
    %51 = vector.broadcast %cst_28 : f32 to vector<8x1xf32>
    %52 = arith.divf %50, %51 : vector<8x1xf32>
    %53 = vector.broadcast %45 : vector<8x1xf32> to vector<8x32xf32>
    %54 = arith.subf %39, %53 : vector<8x32xf32>
    %cst_29 = arith.constant 9.99999974E-6 : f32
    %55 = vector.broadcast %cst_29 : f32 to vector<8x1xf32>
    %56 = arith.addf %52, %55 : vector<8x1xf32>
    %57 = math.rsqrt %56 : vector<8x1xf32>
    %58 = vector.broadcast %57 : vector<8x1xf32> to vector<8x32xf32>
    %59 = arith.mulf %54, %58 : vector<8x32xf32>
    %60 = vector.broadcast %40 : vector<1x32xf32> to vector<8x32xf32>
    %61 = arith.mulf %59, %60 : vector<8x32xf32>
    %62 = vector.broadcast %41 : vector<1x32xf32> to vector<8x32xf32>
    %63 = arith.addf %61, %62 : vector<8x32xf32>
    %cst_30 = arith.constant 0.000000e+00 : f32
    %64 = vector.broadcast %cst_30 : f32 to vector<8x32xf32>
    %65 = arith.maximumf %63, %64 : vector<8x32xf32>
    %c0_31 = arith.constant 0 : index
    %c0_32 = arith.constant 0 : index
    %66 = vector.load %arg10[%c0_31, %c0_32] : memref<32x32xf32, #tpu.memory_space<vmem>>, vector<32x32xf32>
    %cst_33 = arith.constant dense<0.000000e+00> : vector<8x32xf32>
    %67 = tpu.matmul %65, %66, %cst_33 {dimension_numbers = #tpu.dot_dimension_numbers<[1], [0], [0], [1], [0, 0, 1, 1], [], []>} : vector<8x32xf32>, vector<32x32xf32>, vector<8x32xf32> -> vector<8x32xf32>
    %c0_34 = arith.constant 0 : index
    %c0_35 = arith.constant 0 : index
    %68 = vector.load %arg11[%c0_34, %c0_35] : memref<1x32xf32, #tpu.memory_space<vmem>>, vector<1x32xf32>
    %69 = vector.broadcast %68 : vector<1x32xf32> to vector<8x32xf32>
    %70 = arith.addf %67, %69 : vector<8x32xf32>
    %c8_i32 = arith.constant 8 : i32
    %71 = arith.muli %arg0, %c8_i32 : i32
    %72 = tpu.iota {dimensions = array<i32: 0>} : vector<8x1xi32>
    %73 = vector.broadcast %71 : i32 to vector<8x1xi32>
    %74 = arith.addi %73, %72 : vector<8x1xi32>
    %c35_i32 = arith.constant 35 : i32
    %75 = vector.broadcast %c35_i32 : i32 to vector<8x1xi32>
    %76 = arith.cmpi slt, %74, %75 : vector<8x1xi32>
    %77 = arith.extui %76 : vector<8x1xi1> to vector<8x1xi32>
    %78 = arith.sitofp %77 : vector<8x1xi32> to vector<8x1xf32>
    %79 = vector.broadcast %78 : vector<8x1xf32> to vector<8x32xf32>
    %80 = arith.mulf %70, %79 : vector<8x32xf32>
    %c0_36 = arith.constant 0 : index
    %c0_37 = arith.constant 0 : index
    %81 = vector.load %arg15[%c0_36, %c0_37] : memref<32x32xf32, #tpu.memory_space<vmem>>, vector<32x32xf32>
    %cst_38 = arith.constant dense<0.000000e+00> : vector<32x32xf32>
    %82 = tpu.matmul %80, %80, %cst_38 {dimension_numbers = #tpu.dot_dimension_numbers<[0], [0], [1], [1], [0, 1, 1, 1], [], []>} : vector<8x32xf32>, vector<8x32xf32>, vector<32x32xf32> -> vector<32x32xf32>
    %83 = arith.addf %81, %82 : vector<32x32xf32>
    %c0_39 = arith.constant 0 : index
    %c0_40 = arith.constant 0 : index
    %84 = vector.load %arg15[%c0_39, %c0_40] : memref<32x32xf32, #tpu.memory_space<vmem>>, vector<32x32xf32>
    tpu.vector_store %arg15[%c0_39, %c0_40], %83 {strides = array<i32>} : memref<32x32xf32, #tpu.memory_space<vmem>>, vector<32x32xf32>,
    %c0_41 = arith.constant 0 : index
    %c0_42 = arith.constant 0 : index
    %85 = vector.load %arg16[%c0_41, %c0_42] : memref<1x32xf32, #tpu.memory_space<vmem>>, vector<1x32xf32>
    %cst_43 = arith.constant dense<0.000000e+00> : vector<32xf32>
    %86 = vector.multi_reduction <add>, %80, %cst_43 [0] : vector<8x32xf32> to vector<32xf32>
    %87 = vector.shape_cast %86 : vector<32xf32> to vector<1x32xf32>
    %88 = arith.addf %85, %87 : vector<1x32xf32>
    %c0_44 = arith.constant 0 : index
    %c0_45 = arith.constant 0 : index
    %89 = vector.load %arg16[%c0_44, %c0_45] : memref<1x32xf32, #tpu.memory_space<vmem>>, vector<1x32xf32>
    tpu.vector_store %arg16[%c0_44, %c0_45], %88 {strides = array<i32>} : memref<1x32xf32, #tpu.memory_space<vmem>>, vector<1x32xf32>,
    %90 = arith.mulf %80, %80 : vector<8x32xf32>
    %cst_46 = arith.constant dense<0.000000e+00> : vector<8xf32>
    %91 = vector.multi_reduction <add>, %90, %cst_46 [1] : vector<8x32xf32> to vector<8xf32>
    %92 = vector.shape_cast %91 : vector<8xf32> to vector<8x1xf32>
    %93 = math.sqrt %92 : vector<8x1xf32>
    %94 = arith.mulf %3, %3 : vector<8x32xf32>
    %cst_47 = arith.constant dense<0.000000e+00> : vector<8xf32>
    %95 = vector.multi_reduction <add>, %94, %cst_47 [1] : vector<8x32xf32> to vector<8xf32>
    %96 = vector.shape_cast %95 : vector<8xf32> to vector<8x1xf32>
    %97 = math.sqrt %96 : vector<8x1xf32>
    %98 = arith.mulf %97, %78 : vector<8x1xf32>
    %c0_48 = arith.constant 0 : index
    %c0_49 = arith.constant 0 : index
    %99 = vector.load %arg17[%c0_48, %c0_49] : memref<1x1xf32, #tpu.memory_space<vmem>>, vector<1x1xf32>
    %cst_50 = arith.constant dense<0.000000e+00> : vector<8xf32>
    %100 = vector.multi_reduction <add>, %93, %cst_50 [1] : vector<8x1xf32> to vector<8xf32>
    %101 = vector.shape_cast %100 : vector<8xf32> to vector<8x1xf32>
    %cst_51 = arith.constant dense<0.000000e+00> : vector<1xf32>
    %102 = vector.multi_reduction <add>, %101, %cst_51 [0] : vector<8x1xf32> to vector<1xf32>
    %103 = vector.shape_cast %102 : vector<1xf32> to vector<1x1xf32>
    %104 = arith.addf %99, %103 : vector<1x1xf32>
    %c0_52 = arith.constant 0 : index
    %c0_53 = arith.constant 0 : index
    %105 = vector.load %arg17[%c0_52, %c0_53] : memref<1x1xf32, #tpu.memory_space<vmem>>, vector<1x1xf32>
    tpu.vector_store %arg17[%c0_52, %c0_53], %104 {strides = array<i32>} : memref<1x1xf32, #tpu.memory_space<vmem>>, vector<1x1xf32>,
    %c0_54 = arith.constant 0 : index
    %c0_55 = arith.constant 0 : index
    %106 = vector.load %arg18[%c0_54, %c0_55] : memref<1x1xf32, #tpu.memory_space<vmem>>, vector<1x1xf32>
    %cst_56 = arith.constant dense<0.000000e+00> : vector<8xf32>
    %107 = vector.multi_reduction <add>, %98, %cst_56 [1] : vector<8x1xf32> to vector<8xf32>
    %108 = vector.shape_cast %107 : vector<8xf32> to vector<8x1xf32>
    %cst_57 = arith.constant dense<0.000000e+00> : vector<1xf32>
    %109 = vector.multi_reduction <add>, %108, %cst_57 [0] : vector<8x1xf32> to vector<1xf32>
    %110 = vector.shape_cast %109 : vector<1xf32> to vector<1x1xf32>
    %111 = arith.addf %106, %110 : vector<1x1xf32>
    %c0_58 = arith.constant 0 : index
    %c0_59 = arith.constant 0 : index
    %112 = vector.load %arg18[%c0_58, %c0_59] : memref<1x1xf32, #tpu.memory_space<vmem>>, vector<1x1xf32>
    tpu.vector_store %arg18[%c0_58, %c0_59], %111 {strides = array<i32>} : memref<1x1xf32, #tpu.memory_space<vmem>>, vector<1x1xf32>,
    %c4_i32 = arith.constant 4 : i32
    %113 = arith.cmpi eq, %arg0, %c4_i32 : i32
    %114 = arith.extui %113 : i1 to i32
    %c0_i32_60 = arith.constant 0 : i32
    %115 = arith.cmpi ne, %114, %c0_i32_60 : i32
    scf.if %115 {
      %c0_61 = arith.constant 0 : index
      %c0_62 = arith.constant 0 : index
      %116 = vector.load %arg15[%c0_61, %c0_62] : memref<32x32xf32, #tpu.memory_space<vmem>>, vector<32x32xf32>
      %c0_63 = arith.constant 0 : index
      %c0_64 = arith.constant 0 : index
      %117 = vector.load %arg16[%c0_63, %c0_64] : memref<1x32xf32, #tpu.memory_space<vmem>>, vector<1x32xf32>
      %cst_65 = arith.constant dense<0.000000e+00> : vector<32x32xf32>
      %118 = tpu.matmul %117, %117, %cst_65 {dimension_numbers = #tpu.dot_dimension_numbers<[0], [0], [1], [1], [0, 1, 1, 1], [], []>} : vector<1x32xf32>, vector<1x32xf32>, vector<32x32xf32> -> vector<32x32xf32>
      %cst_66 = arith.constant 0.0285714287 : f32
      %119 = vector.broadcast %cst_66 : f32 to vector<32x32xf32>
      %120 = arith.mulf %118, %119 : vector<32x32xf32>
      %121 = arith.subf %116, %120 : vector<32x32xf32>
      %cst_67 = arith.constant 0.0294117648 : f32
      %122 = vector.broadcast %cst_67 : f32 to vector<32x32xf32>
      %123 = arith.mulf %121, %122 : vector<32x32xf32>
      %124 = tpu.iota {dimensions = array<i32: 0>} : vector<32x32xi32>
      %125 = tpu.iota {dimensions = array<i32: 1>} : vector<32x32xi32>
      %126 = arith.cmpi eq, %124, %125 : vector<32x32xi32>
      %cst_68 = arith.constant 0.000000e+00 : f32
      %127 = vector.broadcast %cst_68 : f32 to vector<32x32xf32>
      %128 = arith.select %126, %123, %127 : vector<32x32xi1>, vector<32x32xf32>
      %cst_69 = arith.constant dense<0.000000e+00> : vector<32xf32>
      %129 = vector.multi_reduction <add>, %128, %cst_69 [0] : vector<32x32xf32> to vector<32xf32>
      %130 = vector.shape_cast %129 : vector<32xf32> to vector<1x32xf32>
      %cst_70 = arith.constant 9.99999974E-5 : f32
      %131 = vector.broadcast %cst_70 : f32 to vector<1x32xf32>
      %132 = arith.addf %130, %131 : vector<1x32xf32>
      %133 = math.sqrt %132 : vector<1x32xf32>
      %cst_71 = arith.constant 1.000000e+00 : f32
      %134 = vector.broadcast %cst_71 : f32 to vector<1x32xf32>
      %135 = arith.subf %134, %133 : vector<1x32xf32>
      %cst_72 = arith.constant 0.000000e+00 : f32
      %136 = vector.broadcast %cst_72 : f32 to vector<1x32xf32>
      %137 = arith.maximumf %135, %136 : vector<1x32xf32>
      %cst_73 = arith.constant dense<0.000000e+00> : vector<1xf32>
      %138 = vector.multi_reduction <add>, %137, %cst_73 [1] : vector<1x32xf32> to vector<1xf32>
      %139 = vector.shape_cast %138 : vector<1xf32> to vector<1x1xf32>
      %cst_74 = arith.constant 3.200000e+01 : f32
      %140 = vector.broadcast %cst_74 : f32 to vector<1x1xf32>
      %141 = arith.divf %139, %140 : vector<1x1xf32>
      %cst_75 = arith.constant 0.000000e+00 : f32
      %142 = vector.broadcast %cst_75 : f32 to vector<32x32xf32>
      %143 = arith.select %126, %142, %123 : vector<32x32xi1>, vector<32x32xf32>
      %144 = arith.mulf %143, %143 : vector<32x32xf32>
      %cst_76 = arith.constant dense<0.000000e+00> : vector<32xf32>
      %145 = vector.multi_reduction <add>, %144, %cst_76 [1] : vector<32x32xf32> to vector<32xf32>
      %146 = vector.shape_cast %145 : vector<32xf32> to vector<32x1xf32>
      %cst_77 = arith.constant dense<0.000000e+00> : vector<1xf32>
      %147 = vector.multi_reduction <add>, %146, %cst_77 [0] : vector<32x1xf32> to vector<1xf32>
      %148 = vector.shape_cast %147 : vector<1xf32> to vector<1x1xf32>
      %cst_78 = arith.constant 3.125000e-02 : f32
      %149 = vector.broadcast %cst_78 : f32 to vector<1x1xf32>
      %150 = arith.mulf %148, %149 : vector<1x1xf32>
      %cst_79 = arith.constant 0.0285714287 : f32
      %151 = vector.broadcast %cst_79 : f32 to vector<1x32xf32>
      %152 = arith.mulf %117, %151 : vector<1x32xf32>
      %cst_80 = arith.constant dense<0.000000e+00> : vector<1xf32>
      %153 = vector.multi_reduction <add>, %152, %cst_80 [1] : vector<1x32xf32> to vector<1xf32>
      %154 = vector.shape_cast %153 : vector<1xf32> to vector<1x1xf32>
      %cst_81 = arith.constant dense<0.000000e+00> : vector<1xf32>
      %155 = vector.multi_reduction <add>, %154, %cst_81 [0] : vector<1x1xf32> to vector<1xf32>
      %156 = vector.shape_cast %155 : vector<1xf32> to vector<1x1xf32>
      %cst_82 = arith.constant 3.125000e-02 : f32
      %157 = vector.broadcast %cst_82 : f32 to vector<1x1xf32>
      %158 = arith.mulf %156, %157 : vector<1x1xf32>
      %159 = tpu.iota {dimensions = array<i32: 1>} : vector<1x128xi32>
      %c0_i32_83 = arith.constant 0 : i32
      %160 = vector.broadcast %c0_i32_83 : i32 to vector<1x128xi32>
      %161 = arith.cmpi eq, %159, %160 : vector<1x128xi32>
      %cst_84 = arith.constant 0.000000e+00 : f32
      %162 = vector.shape_cast %141 : vector<1x1xf32> to vector<1x1xf32>
      %163 = vector.broadcast %162 : vector<1x1xf32> to vector<1x128xf32>
      %164 = vector.broadcast %cst_84 : f32 to vector<1x128xf32>
      %165 = arith.select %161, %163, %164 : vector<1x128xi1>, vector<1x128xf32>
      %c1_i32 = arith.constant 1 : i32
      %166 = vector.broadcast %c1_i32 : i32 to vector<1x128xi32>
      %167 = arith.cmpi eq, %159, %166 : vector<1x128xi32>
      %cst_85 = arith.constant 0.000000e+00 : f32
      %168 = vector.shape_cast %150 : vector<1x1xf32> to vector<1x1xf32>
      %169 = vector.broadcast %168 : vector<1x1xf32> to vector<1x128xf32>
      %170 = vector.broadcast %cst_85 : f32 to vector<1x128xf32>
      %171 = arith.select %167, %169, %170 : vector<1x128xi1>, vector<1x128xf32>
      %172 = arith.addf %165, %171 : vector<1x128xf32>
      %c2_i32 = arith.constant 2 : i32
      %173 = vector.broadcast %c2_i32 : i32 to vector<1x128xi32>
      %174 = arith.cmpi eq, %159, %173 : vector<1x128xi32>
      %cst_86 = arith.constant 0.000000e+00 : f32
      %175 = vector.shape_cast %158 : vector<1x1xf32> to vector<1x1xf32>
      %176 = vector.broadcast %175 : vector<1x1xf32> to vector<1x128xf32>
      %177 = vector.broadcast %cst_86 : f32 to vector<1x128xf32>
      %178 = arith.select %174, %176, %177 : vector<1x128xi1>, vector<1x128xf32>
      %179 = arith.addf %172, %178 : vector<1x128xf32>
      %c0_87 = arith.constant 0 : index
      %c0_88 = arith.constant 0 : index
      %180 = vector.load %arg17[%c0_87, %c0_88] : memref<1x1xf32, #tpu.memory_space<vmem>>, vector<1x1xf32>
      %cst_89 = arith.constant 0.0285714287 : f32
      %181 = vector.broadcast %cst_89 : f32 to vector<1x1xf32>
      %182 = arith.mulf %180, %181 : vector<1x1xf32>
      %c0_90 = arith.constant 0 : index
      %c0_91 = arith.constant 0 : index
      %183 = vector.load %arg18[%c0_90, %c0_91] : memref<1x1xf32, #tpu.memory_space<vmem>>, vector<1x1xf32>
      %cst_92 = arith.constant 0.0285714287 : f32
      %184 = vector.broadcast %cst_92 : f32 to vector<1x1xf32>
      %185 = arith.mulf %183, %184 : vector<1x1xf32>
      %c3_i32 = arith.constant 3 : i32
      %186 = vector.broadcast %c3_i32 : i32 to vector<1x128xi32>
      %187 = arith.cmpi eq, %159, %186 : vector<1x128xi32>
      %cst_93 = arith.constant 0.000000e+00 : f32
      %188 = vector.shape_cast %182 : vector<1x1xf32> to vector<1x1xf32>
      %189 = vector.broadcast %188 : vector<1x1xf32> to vector<1x128xf32>
      %190 = vector.broadcast %cst_93 : f32 to vector<1x128xf32>
      %191 = arith.select %187, %189, %190 : vector<1x128xi1>, vector<1x128xf32>
      %192 = arith.addf %179, %191 : vector<1x128xf32>
      %c4_i32_94 = arith.constant 4 : i32
      %193 = vector.broadcast %c4_i32_94 : i32 to vector<1x128xi32>
      %194 = arith.cmpi eq, %159, %193 : vector<1x128xi32>
      %cst_95 = arith.constant 0.000000e+00 : f32
      %195 = vector.shape_cast %185 : vector<1x1xf32> to vector<1x1xf32>
      %196 = vector.broadcast %195 : vector<1x1xf32> to vector<1x128xf32>
      %197 = vector.broadcast %cst_95 : f32 to vector<1x128xf32>
      %198 = arith.select %194, %196, %197 : vector<1x128xi1>, vector<1x128xf32>
      %199 = arith.addf %192, %198 : vector<1x128xf32>
      %c5_i32 = arith.constant 5 : i32
      %200 = vector.broadcast %c5_i32 : i32 to vector<1x128xi32>
      %201 = arith.cmpi eq, %159, %200 : vector<1x128xi32>
      %202 = arith.subf %182, %185 : vector<1x1xf32>
      %cst_96 = arith.constant 0.000000e+00 : f32
      %203 = vector.shape_cast %202 : vector<1x1xf32> to vector<1x1xf32>
      %204 = vector.broadcast %203 : vector<1x1xf32> to vector<1x128xf32>
      %205 = vector.broadcast %cst_96 : f32 to vector<1x128xf32>
      %206 = arith.select %201, %204, %205 : vector<1x128xi1>, vector<1x128xf32>
      %207 = arith.addf %199, %206 : vector<1x128xf32>
      %c0_97 = arith.constant 0 : index
      %c0_98 = arith.constant 0 : index
      %208 = vector.load %arg12[%c0_97, %c0_98] : memref<32x32xf32, #tpu.memory_space<vmem>>, vector<32x32xf32>
      tpu.vector_store %arg12[%c0_97, %c0_98], %123 {strides = array<i32>} : memref<32x32xf32, #tpu.memory_space<vmem>>, vector<32x32xf32>,
      %c0_99 = arith.constant 0 : index
      %c0_100 = arith.constant 0 : index
      %209 = vector.load %arg13[%c0_99, %c0_100] : memref<1x32xf32, #tpu.memory_space<vmem>>, vector<1x32xf32>
      tpu.vector_store %arg13[%c0_99, %c0_100], %133 {strides = array<i32>} : memref<1x32xf32, #tpu.memory_space<vmem>>, vector<1x32xf32>,
      %c0_101 = arith.constant 0 : index
      %c0_102 = arith.constant 0 : index
      %210 = vector.load %arg14[%c0_101, %c0_102] : memref<1x128xf32, #tpu.memory_space<vmem>>, vector<1x128xf32>
      tpu.vector_store %arg14[%c0_101, %c0_102], %207 {strides = array<i32>} : memref<1x128xf32, #tpu.memory_space<vmem>>, vector<1x128xf32>,
    } else {
    }
    return
  }
  func.func @transform_0(%arg0: i32) -> (i32, i32) {
    %c0_i32 = arith.constant 0 : i32
    %c0_i32_0 = arith.constant 0 : i32
    return %arg0, %c0_i32 : i32, i32
  }
  func.func @transform_1(%arg0: i32) -> (i32, i32) {
    %c0_i32 = arith.constant 0 : i32
    %c0_i32_0 = arith.constant 0 : i32
    %c0_i32_1 = arith.constant 0 : i32
    return %c0_i32, %c0_i32_0 : i32, i32
  }
  func.func @transform_2(%arg0: i32) -> (i32, i32) {
    %c0_i32 = arith.constant 0 : i32
    %c0_i32_0 = arith.constant 0 : i32
    %c0_i32_1 = arith.constant 0 : i32
    return %c0_i32, %c0_i32_0 : i32, i32
  }
  func.func @transform_3(%arg0: i32) -> (i32, i32) {
    %c0_i32 = arith.constant 0 : i32
    %c0_i32_0 = arith.constant 0 : i32
    %c0_i32_1 = arith.constant 0 : i32
    return %c0_i32, %c0_i32_0 : i32, i32
  }
  func.func @transform_4(%arg0: i32) -> (i32, i32) {
    %c0_i32 = arith.constant 0 : i32
    %c0_i32_0 = arith.constant 0 : i32
    %c0_i32_1 = arith.constant 0 : i32
    return %c0_i32, %c0_i32_0 : i32, i32
  }
  func.func @transform_5(%arg0: i32) -> (i32, i32) {
    %c0_i32 = arith.constant 0 : i32
    %c0_i32_0 = arith.constant 0 : i32
    %c0_i32_1 = arith.constant 0 : i32
    return %c0_i32, %c0_i32_0 : i32, i32
  }
  func.func @transform_6(%arg0: i32) -> (i32, i32) {
    %c0_i32 = arith.constant 0 : i32
    %c0_i32_0 = arith.constant 0 : i32
    %c0_i32_1 = arith.constant 0 : i32
    return %c0_i32, %c0_i32_0 : i32, i32
  }
  func.func @transform_7(%arg0: i32) -> (i32, i32) {
    %c0_i32 = arith.constant 0 : i32
    %c0_i32_0 = arith.constant 0 : i32
    %c0_i32_1 = arith.constant 0 : i32
    return %c0_i32, %c0_i32_0 : i32, i32
  }
  func.func @transform_8(%arg0: i32) -> (i32, i32) {
    %c0_i32 = arith.constant 0 : i32
    %c0_i32_0 = arith.constant 0 : i32
    %c0_i32_1 = arith.constant 0 : i32
    return %c0_i32, %c0_i32_0 : i32, i32
  }
  func.func @transform_9(%arg0: i32) -> (i32, i32) {
    %c0_i32 = arith.constant 0 : i32
    %c0_i32_0 = arith.constant 0 : i32
    %c0_i32_1 = arith.constant 0 : i32
    return %c0_i32, %c0_i32_0 : i32, i32
  }
  func.func @transform_10(%arg0: i32) -> (i32, i32) {
    %c0_i32 = arith.constant 0 : i32
    %c0_i32_0 = arith.constant 0 : i32
    %c0_i32_1 = arith.constant 0 : i32
    return %c0_i32, %c0_i32_0 : i32, i32
  }
  func.func @transform_11(%arg0: i32) -> (i32, i32) {
    %c0_i32 = arith.constant 0 : i32
    %c0_i32_0 = arith.constant 0 : i32
    %c0_i32_1 = arith.constant 0 : i32
    return %c0_i32, %c0_i32_0 : i32, i32
  }
  func.func @transform_12(%arg0: i32) -> (i32, i32) {
    %c0_i32 = arith.constant 0 : i32
    %c0_i32_0 = arith.constant 0 : i32
    %c0_i32_1 = arith.constant 0 : i32
    return %c0_i32, %c0_i32_0 : i32, i32
  }
  func.func @transform_13(%arg0: i32) -> (i32, i32) {
    %c0_i32 = arith.constant 0 : i32
    %c0_i32_0 = arith.constant 0 : i32
    %c0_i32_1 = arith.constant 0 : i32
    return %c0_i32, %c0_i32_0 : i32, i32
  }
}

</mosaic_0001>

<llo_original>
// kernel: tpu_custom_call.1
$region0: #{tpu_custom_call.1}
  #allocation0 [shape = 'u32[]', space=smem, size = 0x4, offset = 0x4, fixed_abs, tag = 'smem constant byte address 0x4 - core index']
  #allocation1 [shape = 'u32[144,128]{1,0:T(1,128)}', space=vmem, size = 0x12000, scoped, tag = 'internal scratch']
  #allocation2 [shape = 'f32[32,32]{1,0:T(8,128)}', space=vmem, size = 0x4000, scoped, tag = 'scratch operand']
  #allocation3 [shape = 'f32[1,32]{1,0:T(1,128)}', space=vmem, size = 0x200, scoped, tag = 'scratch operand']
  #allocation4 [shape = 'f32[1,1]{1,0:T(1,128)}', space=vmem, size = 0x200, scoped, tag = 'scratch operand']
  #allocation5 [shape = 'f32[1,1]{1,0:T(1,128)}', space=vmem, size = 0x200, scoped, tag = 'scratch operand']
  %s0 = inlined_call_operand.vmem [shape: f32[40,32], index: 0, kind: input, shape index: {}]
  %s1 = inlined_call_operand.vmem [shape: f32[32,32], index: 1, kind: input, shape index: {}]
  %s2 = inlined_call_operand.vmem [shape: f32[1,32], index: 2, kind: input, shape index: {}]
  %s3 = inlined_call_operand.vmem [shape: f32[1,32], index: 3, kind: input, shape index: {}]
  %s4 = inlined_call_operand.hbm [shape: f32[1,32], index: 4, kind: input, shape index: {}]
  %s5 = inlined_call_operand.vmem [shape: f32[32,32], index: 5, kind: input, shape index: {}]
  %s6 = inlined_call_operand.hbm [shape: f32[1,32], index: 6, kind: input, shape index: {}]
  %s7 = inlined_call_operand.hbm [shape: f32[1,32], index: 7, kind: input, shape index: {}]
  %s8 = inlined_call_operand.vmem [shape: f32[1,32], index: 8, kind: input, shape index: {}]
  %s9 = inlined_call_operand.vmem [shape: f32[32,32], index: 9, kind: input, shape index: {}]
  %s10 = inlined_call_operand.vmem [shape: f32[1,32], index: 10, kind: input, shape index: {}]
  %s11 = inlined_call_operand.hbm [shape: f32[32,32], index: 11, kind: output, shape index: {0}]
  %s12 = inlined_call_operand.hbm [shape: f32[1,32], index: 12, kind: output, shape index: {1}]
  %s13 = inlined_call_operand.hbm [shape: f32[1,128], index: 13, kind: output, shape index: {2}]
  %14 = xla_tuple %s11, %s12, %s13
  %s15 = sld [smem:[#allocation0]]
  $region113: #{tpu_custom_call.1} parent=0
    _
  %s17 = ssub.s32 1, %s15
  %s18 = scalar_select 0, %s17, %s15
  $region1: #{tpu_custom_call.1} parent=0
    #allocation6 [shape = 'u8[512]{0}', space=vmem, size = 0x400, scoped, tag = 'input window, operand 4, single buffered']
    #allocation7 [shape = 's32[2]{0}', space=sflag, size = 0x8, scoped, tag = 'scoped memory for tpu_custom_call.1']
    #allocation8 [shape = 's32[2]{0}', space=sflag, size = 0x8, scoped, tag = 'scoped memory for tpu_custom_call.1']
    #allocation9 [shape = 'u8[512]{0}', space=vmem, size = 0x400, scoped, tag = 'input window, operand 6, single buffered']
    #allocation10 [shape = 's32[1]{0}', space=sflag, size = 0x4, scoped, tag = 'scoped memory for tpu_custom_call.1']
    #allocation11 [shape = 'u8[512]{0}', space=vmem, size = 0x400, scoped, tag = 'input window, operand 7, single buffered']
    #allocation12 [shape = 'u8[16384]{0}', space=vmem, size = 0x4000, scoped, tag = 'output window, operand 0, single buffered']
    #allocation13 [shape = 'u8[512]{0}', space=vmem, size = 0x400, scoped, tag = 'output window, operand 1, single buffered']
    #allocation14 [shape = 's32[1]{0}', space=sflag, size = 0x4, scoped, tag = 'scoped memory for tpu_custom_call.1']
    #allocation15 [shape = 'u8[512]{0}', space=vmem, size = 0x400, scoped, tag = 'output window, operand 2, single buffered']
    %19 = vsyncpa [#allocation7], 0
    %20 = vsyncpa [#allocation10], 0
    %21 = vsyncpa [#allocation8], 0
    %22 = vsyncpa [#allocation14], 0
    loop: start=0, step=1, limit=7
    $region2: #{tpu_custom_call.1} parent=1 // loop_pre_header
      _
    $region3: #{tpu_custom_call.1} parent=1 // loop_header
      %s24 = sphi 0, %s28
      %p25 = scmp.ge.s32.totalorder %s24, 7
      %s34 = sphi 0, %s36
      %s37 = sphi 0, %s34
      %s38 = sphi 0, %s37
      %s54 = sphi 0, %s38
      %s58 = sphi 0, %s58
      %s60 = sphi 0, %s58
      %s61 = sphi 0, %s60
      %s75 = sphi 0, %s61
      %s79 = sphi 0, %s79
      %s81 = sphi 0, %s79
      %s82 = sphi 0, %s81
      %s96 = sphi 0, %s82
      %s100 = sphi 0, %s100
      %s102 = sphi 0, %s100
      %s103 = sphi 0, %s102
      %s117 = sphi 0, %s103
      %s121 = sphi 0, %s121
      %s123 = sphi 0, %s121
      %s124 = sphi 0, %s123
      %s138 = sphi 0, %s124
      %s142 = sphi 0, %s142
      %s144 = sphi 0, %s142
      %s145 = sphi 0, %s144
      %s159 = sphi 0, %s145
      %s163 = sphi 0, %s163
      %s165 = sphi 0, %s163
      %s166 = sphi 0, %s165
      %s180 = sphi 0, %s166
      %s184 = sphi 0, %s184
      %s186 = sphi 0, %s184
      %s187 = sphi 0, %s186
      %s201 = sphi 0, %s187
      %s205 = sphi 0, %s205
      %s207 = sphi 0, %s205
      %s208 = sphi 0, %s207
      %s222 = sphi 0, %s208
      %s226 = sphi 0, %s226
      %s228 = sphi 0, %s226
      %s229 = sphi 0, %s228
      %s243 = sphi 0, %s229
      %s247 = sphi 0, %s247
      %s249 = sphi 0, %s247
      %s250 = sphi 0, %s249
      %s264 = sphi 0, %s250
      %s268 = sphi 0, %s268
      %s270 = sphi 0, %s268
      %s271 = sphi 0, %s270
      %s285 = sphi 0, %s271
      %s289 = sphi 0, %s289
      %s291 = sphi 0, %s289
      %s292 = sphi 0, %s291
      %s306 = sphi 0, %s292
      %s310 = sphi 0, %s310
      %s312 = sphi 0, %s310
      %s313 = sphi 0, %s312
      %s327 = sphi 0, %s313
    $region4: #{tpu_custom_call.1} parent=1 // loop_header_branch
      %27 = sbr.rel (%p25) target = $region8
    $region5: #{tpu_custom_call.1} parent=1 // loop_body
      %s29 = ssub.s32 %s24, 1
      %s30 = ssub.s32 %s24, 2
      %s31 = sadd.s32 %s24, 1
      %s32 = ssub.s32 %s24, %s31
      %p33 = scmp.eq.s32.totalorder %s32, 0
      %s35 = sadd.s32 %s34, 1
      %s36 = scalar_select %p33, %s34, %s35
      %p39 = pneg %p33
      %p40 = scmp.eq.s32.totalorder %s24, 4
      %p41 = por %p39, %p40
      %p42 = scmp.ne.s32.totalorder %s34, %s37
      %p43 = scmp.eq.s32.totalorder %s24, 0
      %p44 = por %p42, %p43
      %p45 = scmp.ne.s32.totalorder %s34, %s37
      %p46 = scmp.eq.s32.totalorder %s29, 4
      %p47 = por %p45, %p46
      %p48 = scmp.ne.s32.totalorder %s37, %s38
      %p49 = scmp.eq.s32.totalorder %s29, 0
      %p50 = por %p48, %p49
      %p51 = scmp.ne.s32.totalorder %s37, %s38
      %p52 = scmp.eq.s32.totalorder %s30, 4
      %p53 = por %p51, %p52
      %p55 = scmp.ne.s32.totalorder %s38, %s54
      %p56 = scmp.eq.s32.totalorder %s30, 0
      %p57 = por %p55, %p56
      %s59 = sadd.s32 %s58, 1
      %p62 = scmp.eq.s32.totalorder %s24, 4
      %p63 = scmp.ne.s32.totalorder %s58, %s60
      %p64 = scmp.eq.s32.totalorder %s24, 0
      %p65 = por %p63, %p64
      %p66 = scmp.ne.s32.totalorder %s58, %s60
      %p67 = scmp.eq.s32.totalorder %s29, 4
      %p68 = por %p66, %p67
      %p69 = scmp.ne.s32.totalorder %s60, %s61
      %p70 = scmp.eq.s32.totalorder %s29, 0
      %p71 = por %p69, %p70
      %p72 = scmp.ne.s32.totalorder %s60, %s61
      %p73 = scmp.eq.s32.totalorder %s30, 4
      %p74 = por %p72, %p73
      %p76 = scmp.ne.s32.totalorder %s61, %s75
      %p77 = scmp.eq.s32.totalorder %s30, 0
      %p78 = por %p76, %p77
      %s80 = sadd.s32 %s79, 1
      %p83 = scmp.eq.s32.totalorder %s24, 4
      %p84 = scmp.ne.s32.totalorder %s79, %s81
      %p85 = scmp.eq.s32.totalorder %s24, 0
      %p86 = por %p84, %p85
      %p87 = scmp.ne.s32.totalorder %s79, %s81
      %p88 = scmp.eq.s32.totalorder %s29, 4
      %p89 = por %p87, %p88
      %p90 = scmp.ne.s32.totalorder %s81, %s82
      %p91 = scmp.eq.s32.totalorder %s29, 0
      %p92 = por %p90, %p91
      %p93 = scmp.ne.s32.totalorder %s81, %s82
      %p94 = scmp.eq.s32.totalorder %s30, 4
      %p95 = por %p93, %p94
      %p97 = scmp.ne.s32.totalorder %s82, %s96
      %p98 = scmp.eq.s32.totalorder %s30, 0
      %p99 = por %p97, %p98
      %s101 = sadd.s32 %s100, 1
      %p104 = scmp.eq.s32.totalorder %s24, 4
      %p105 = scmp.ne.s32.totalorder %s100, %s102
      %p106 = scmp.eq.s32.totalorder %s24, 0
      %p107 = por %p105, %p106
      %p108 = scmp.ne.s32.totalorder %s100, %s102
      %p109 = scmp.eq.s32.totalorder %s29, 4
      %p110 = por %p108, %p109
      %p111 = scmp.ne.s32.totalorder %s102, %s103
      %p112 = scmp.eq.s32.totalorder %s29, 0
      %p113 = por %p111, %p112
      %p114 = scmp.ne.s32.totalorder %s102, %s103
      %p115 = scmp.eq.s32.totalorder %s30, 4
      %p116 = por %p114, %p115
      %p118 = scmp.ne.s32.totalorder %s103, %s117
      %p119 = scmp.eq.s32.totalorder %s30, 0
      %p120 = por %p118, %p119
      %s122 = sadd.s32 %s121, 1
      %p125 = scmp.eq.s32.totalorder %s24, 4
      %p126 = scmp.ne.s32.totalorder %s121, %s123
      %p127 = scmp.eq.s32.totalorder %s24, 0
      %p128 = por %p126, %p127
      %p129 = scmp.ne.s32.totalorder %s121, %s123
      %p130 = scmp.eq.s32.totalorder %s29, 4
      %p131 = por %p129, %p130
      %p132 = scmp.ne.s32.totalorder %s123, %s124
      %p133 = scmp.eq.s32.totalorder %s29, 0
      %p134 = por %p132, %p133
      %p135 = scmp.ne.s32.totalorder %s123, %s124
      %p136 = scmp.eq.s32.totalorder %s30, 4
      %p137 = por %p135, %p136
      %p139 = scmp.ne.s32.totalorder %s124, %s138
      %p140 = scmp.eq.s32.totalorder %s30, 0
      %p141 = por %p139, %p140
      %s143 = sadd.s32 %s142, 1
      %p146 = scmp.eq.s32.totalorder %s24, 4
      %p147 = scmp.ne.s32.totalorder %s142, %s144
      %p148 = scmp.eq.s32.totalorder %s24, 0
      %p149 = por %p147, %p148
      %p150 = scmp.ne.s32.totalorder %s142, %s144
      %p151 = scmp.eq.s32.totalorder %s29, 4
      %p152 = por %p150, %p151
      %p153 = scmp.ne.s32.totalorder %s144, %s145
      %p154 = scmp.eq.s32.totalorder %s29, 0
      %p155 = por %p153, %p154
      %p156 = scmp.ne.s32.totalorder %s144, %s145
      %p157 = scmp.eq.s32.totalorder %s30, 4
      %p158 = por %p156, %p157
      %p160 = scmp.ne.s32.totalorder %s145, %s159
      %p161 = scmp.eq.s32.totalorder %s30, 0
      %p162 = por %p160, %p161
      %s164 = sadd.s32 %s163, 1
      %p167 = scmp.eq.s32.totalorder %s24, 4
      %p168 = scmp.ne.s32.totalorder %s163, %s165
      %p169 = scmp.eq.s32.totalorder %s24, 0
      %p170 = por %p168, %p169
      %p171 = scmp.ne.s32.totalorder %s163, %s165
      %p172 = scmp.eq.s32.totalorder %s29, 4
      %p173 = por %p171, %p172
      %p174 = scmp.ne.s32.totalorder %s165, %s166
      %p175 = scmp.eq.s32.totalorder %s29, 0
      %p176 = por %p174, %p175
      %p177 = scmp.ne.s32.totalorder %s165, %s166
      %p178 = scmp.eq.s32.totalorder %s30, 4
      %p179 = por %p177, %p178
      %p181 = scmp.ne.s32.totalorder %s166, %s180
      %p182 = scmp.eq.s32.totalorder %s30, 0
      %p183 = por %p181, %p182
      %s185 = sadd.s32 %s184, 1
      %p188 = scmp.eq.s32.totalorder %s24, 4
      %p189 = scmp.ne.s32.totalorder %s184, %s186
      %p190 = scmp.eq.s32.totalorder %s24, 0
      %p191 = por %p189, %p190
      %p192 = scmp.ne.s32.totalorder %s184, %s186
      %p193 = scmp.eq.s32.totalorder %s29, 4
      %p194 = por %p192, %p193
      %p195 = scmp.ne.s32.totalorder %s186, %s187
      %p196 = scmp.eq.s32.totalorder %s29, 0
      %p197 = por %p195, %p196
      %p198 = scmp.ne.s32.totalorder %s186, %s187
      %p199 = scmp.eq.s32.totalorder %s30, 4
      %p200 = por %p198, %p199
      %p202 = scmp.ne.s32.totalorder %s187, %s201
      %p203 = scmp.eq.s32.totalorder %s30, 0
      %p204 = por %p202, %p203
      %s206 = sadd.s32 %s205, 1
      %p209 = scmp.eq.s32.totalorder %s24, 4
      %p210 = scmp.ne.s32.totalorder %s205, %s207
      %p211 = scmp.eq.s32.totalorder %s24, 0
      %p212 = por %p210, %p211
      %p213 = scmp.ne.s32.totalorder %s205, %s207
      %p214 = scmp.eq.s32.totalorder %s29, 4
      %p215 = por %p213, %p214
      %p216 = scmp.ne.s32.totalorder %s207, %s208
      %p217 = scmp.eq.s32.totalorder %s29, 0
      %p218 = por %p216, %p217
      %p219 = scmp.ne.s32.totalorder %s207, %s208
      %p220 = scmp.eq.s32.totalorder %s30, 4
      %p221 = por %p219, %p220
      %p223 = scmp.ne.s32.totalorder %s208, %s222
      %p224 = scmp.eq.s32.totalorder %s30, 0
      %p225 = por %p223, %p224
      %s227 = sadd.s32 %s226, 1
      %p230 = scmp.eq.s32.totalorder %s24, 4
      %p231 = scmp.ne.s32.totalorder %s226, %s228
      %p232 = scmp.eq.s32.totalorder %s24, 0
      %p233 = por %p231, %p232
      %p234 = scmp.ne.s32.totalorder %s226, %s228
      %p235 = scmp.eq.s32.totalorder %s29, 4
      %p236 = por %p234, %p235
      %p237 = scmp.ne.s32.totalorder %s228, %s229
      %p238 = scmp.eq.s32.totalorder %s29, 0
      %p239 = por %p237, %p238
      %p240 = scmp.ne.s32.totalorder %s228, %s229
      %p241 = scmp.eq.s32.totalorder %s30, 4
      %p242 = por %p240, %p241
      %p244 = scmp.ne.s32.totalorder %s229, %s243
      %p245 = scmp.eq.s32.totalorder %s30, 0
      %p246 = por %p244, %p245
      %s248 = sadd.s32 %s247, 1
      %p251 = scmp.eq.s32.totalorder %s24, 4
      %p252 = scmp.ne.s32.totalorder %s247, %s249
      %p253 = scmp.eq.s32.totalorder %s24, 0
      %p254 = por %p252, %p253
      %p255 = scmp.ne.s32.totalorder %s247, %s249
      %p256 = scmp.eq.s32.totalorder %s29, 4
      %p257 = por %p255, %p256
      %p258 = scmp.ne.s32.totalorder %s249, %s250
      %p259 = scmp.eq.s32.totalorder %s29, 0
      %p260 = por %p258, %p259
      %p261 = scmp.ne.s32.totalorder %s249, %s250
      %p262 = scmp.eq.s32.totalorder %s30, 4
      %p263 = por %p261, %p262
      %p265 = scmp.ne.s32.totalorder %s250, %s264
      %p266 = scmp.eq.s32.totalorder %s30, 0
      %p267 = por %p265, %p266
      %s269 = sadd.s32 %s268, 1
      %p272 = scmp.eq.s32.totalorder %s24, 4
      %p273 = scmp.ne.s32.totalorder %s268, %s270
      %p274 = scmp.eq.s32.totalorder %s24, 0
      %p275 = por %p273, %p274
      %p276 = scmp.ne.s32.totalorder %s268, %s270
      %p277 = scmp.eq.s32.totalorder %s29, 4
      %p278 = por %p276, %p277
      %p279 = scmp.ne.s32.totalorder %s270, %s271
      %p280 = scmp.eq.s32.totalorder %s29, 0
      %p281 = por %p279, %p280
      %p282 = scmp.ne.s32.totalorder %s270, %s271
      %p283 = scmp.eq.s32.totalorder %s30, 4
      %p284 = por %p282, %p283
      %p286 = scmp.ne.s32.totalorder %s271, %s285
      %p287 = scmp.eq.s32.totalorder %s30, 0
      %p288 = por %p286, %p287
      %s290 = sadd.s32 %s289, 1
      %p293 = scmp.eq.s32.totalorder %s24, 4
      %p294 = scmp.ne.s32.totalorder %s289, %s291
      %p295 = scmp.eq.s32.totalorder %s24, 0
      %p296 = por %p294, %p295
      %p297 = scmp.ne.s32.totalorder %s289, %s291
      %p298 = scmp.eq.s32.totalorder %s29, 4
      %p299 = por %p297, %p298
      %p300 = scmp.ne.s32.totalorder %s291, %s292
      %p301 = scmp.eq.s32.totalorder %s29, 0
      %p302 = por %p300, %p301
      %p303 = scmp.ne.s32.totalorder %s291, %s292
      %p304 = scmp.eq.s32.totalorder %s30, 4
      %p305 = por %p303, %p304
      %p307 = scmp.ne.s32.totalorder %s292, %s306
      %p308 = scmp.eq.s32.totalorder %s30, 0
      %p309 = por %p307, %p308
      %s311 = sadd.s32 %s310, 1
      %p314 = scmp.eq.s32.totalorder %s24, 4
      %p315 = scmp.ne.s32.totalorder %s310, %s312
      %p316 = scmp.eq.s32.totalorder %s24, 0
      %p317 = por %p315, %p316
      %p318 = scmp.ne.s32.totalorder %s310, %s312
      %p319 = scmp.eq.s32.totalorder %s29, 4
      %p320 = por %p318, %p319
      %p321 = scmp.ne.s32.totalorder %s312, %s313
      %p322 = scmp.eq.s32.totalorder %s29, 0
      %p323 = por %p321, %p322
      %p324 = scmp.ne.s32.totalorder %s312, %s313
      %p325 = scmp.eq.s32.totalorder %s30, 4
      %p326 = por %p324, %p325
      %p328 = scmp.ne.s32.totalorder %s313, %s327
      %p329 = scmp.eq.s32.totalorder %s30, 0
      %p330 = por %p328, %p329
      %p331 = scmp.le.s32.totalorder 1, %s24
      %p332 = scmp.lt.s32.totalorder %s24, 6
      %p333 = pnand %p331, %p332
      %p334 = pneg %p333
      // Predicated region
      $region9: #{tpu_custom_call.1} parent=5 // pred_check
        _
      $region10: #{tpu_custom_call.1} parent=5 // pred_check_branch
        %336 = sbr.rel (%p333) target = $region12
      $region11: #{tpu_custom_call.1} parent=5 // pred_region
        %s337 = ssub.s32 %s24, 1
        // Predicated region
        $region13: #{tpu_custom_call.1} parent=11 // pred_check
          %p338 = pneg %p71
        $region14: #{tpu_custom_call.1} parent=11 // pred_check_branch
          %340 = sbr.rel (%p338) target = $region16
        $region15: #{tpu_custom_call.1} parent=11 // pred_region
          _
        $region16: #{tpu_custom_call.1} parent=11 // pred_fallthru
          _
        // Predicated region
        $region17: #{tpu_custom_call.1} parent=11 // pred_check
          %p341 = pneg %p92
        $region18: #{tpu_custom_call.1} parent=11 // pred_check_branch
          %343 = sbr.rel (%p341) target = $region20
        $region19: #{tpu_custom_call.1} parent=11 // pred_region
          _
        $region20: #{tpu_custom_call.1} parent=11 // pred_fallthru
          _
        // Predicated region
        $region21: #{tpu_custom_call.1} parent=11 // pred_check
          %p344 = pneg %p113
        $region22: #{tpu_custom_call.1} parent=11 // pred_check_branch
          %346 = sbr.rel (%p344) target = $region24
        $region23: #{tpu_custom_call.1} parent=11 // pred_region
          _
        $region24: #{tpu_custom_call.1} parent=11 // pred_fallthru
          _
        // Predicated region
        $region25: #{tpu_custom_call.1} parent=11 // pred_check
          %p347 = pneg %p134
        $region26: #{tpu_custom_call.1} parent=11 // pred_check_branch
          %349 = sbr.rel (%p347) target = $region28
        $region27: #{tpu_custom_call.1} parent=11 // pred_region
          %s351 = ssub.s32 16, 16
          %352 = vsyncadd [#allocation7], %s351
          %s354 = sshll.u32 [#allocation6], 4
          %s355 = int_to_ptr.vmem [resolvable:$true] %s354
          %357 = dma.hbm_to_vmem [thread:$0]  %s4, 16, %s355, [#allocation7]
        $region28: #{tpu_custom_call.1} parent=11 // pred_fallthru
          _
        // Predicated region
        $region29: #{tpu_custom_call.1} parent=11 // pred_check
          %p358 = pneg %p155
        $region30: #{tpu_custom_call.1} parent=11 // pred_check_branch
          %360 = sbr.rel (%p358) target = $region32
        $region31: #{tpu_custom_call.1} parent=11 // pred_region
          _
        $region32: #{tpu_custom_call.1} parent=11 // pred_fallthru
          _
        // Predicated region
        $region33: #{tpu_custom_call.1} parent=11 // pred_check
          %p361 = pneg %p176
        $region34: #{tpu_custom_call.1} parent=11 // pred_check_branch
          %363 = sbr.rel (%p361) target = $region36
        $region35: #{tpu_custom_call.1} parent=11 // pred_region
          %s365 = ssub.s32 16, 16
          %366 = vsyncadd [#allocation10], %s365
          %s368 = sshll.u32 [#allocation9], 4
          %s369 = int_to_ptr.vmem [resolvable:$true] %s368
          %371 = dma.hbm_to_vmem [thread:$0]  %s6, 16, %s369, [#allocation10]
        $region36: #{tpu_custom_call.1} parent=11 // pred_fallthru
          _
        // Predicated region
        $region37: #{tpu_custom_call.1} parent=11 // pred_check
          %p372 = pneg %p197
        $region38: #{tpu_custom_call.1} parent=11 // pred_check_branch
          %374 = sbr.rel (%p372) target = $region40
        $region39: #{tpu_custom_call.1} parent=11 // pred_region
          %s376 = ssub.s32 16, 16
          %377 = vsyncadd [#allocation10], %s376
          %s379 = sshll.u32 [#allocation11], 4
          %s380 = int_to_ptr.vmem [resolvable:$true] %s379
          %382 = dma.hbm_to_vmem [thread:$0]  %s7, 16, %s380, [#allocation10]
        $region40: #{tpu_custom_call.1} parent=11 // pred_fallthru
          _
        // Predicated region
        $region41: #{tpu_custom_call.1} parent=11 // pred_check
          %p383 = pneg %p218
        $region42: #{tpu_custom_call.1} parent=11 // pred_check_branch
          %385 = sbr.rel (%p383) target = $region44
        $region43: #{tpu_custom_call.1} parent=11 // pred_region
          _
        $region44: #{tpu_custom_call.1} parent=11 // pred_fallthru
          _
        // Predicated region
        $region45: #{tpu_custom_call.1} parent=11 // pred_check
          %p386 = pneg %p239
        $region46: #{tpu_custom_call.1} parent=11 // pred_check_branch
          %388 = sbr.rel (%p386) target = $region48
        $region47: #{tpu_custom_call.1} parent=11 // pred_region
          _
        $region48: #{tpu_custom_call.1} parent=11 // pred_fallthru
          _
        // Predicated region
        $region49: #{tpu_custom_call.1} parent=11 // pred_check
          %p389 = pneg %p260
        $region50: #{tpu_custom_call.1} parent=11 // pred_check_branch
          %391 = sbr.rel (%p389) target = $region52
        $region51: #{tpu_custom_call.1} parent=11 // pred_region
          _
        $region52: #{tpu_custom_call.1} parent=11 // pred_fallthru
          _
      $region12: #{tpu_custom_call.1} parent=5 // pred_fallthru
        _
      %p392 = scmp.lt.s32.totalorder %s24, 5
      // Predicated region
      $region53: #{tpu_custom_call.1} parent=5 // pred_check
        %p393 = pneg %p392
      $region54: #{tpu_custom_call.1} parent=5 // pred_check_branch
        %395 = sbr.rel (%p393) target = $region56
      $region55: #{tpu_custom_call.1} parent=5 // pred_region
        // Predicated region
        $region57: #{tpu_custom_call.1} parent=55 // pred_check
          %p396 = pneg %p44
        $region58: #{tpu_custom_call.1} parent=55 // pred_check_branch
          %398 = sbr.rel (%p396) target = $region60
        $region59: #{tpu_custom_call.1} parent=55 // pred_region
          %p399 = scmp.lt.s32.totalorder %s24, 4
          %s400 = scalar_select %p399, %s24, 4
          %s401 = smul.addr %s400, 8
          %s402 = scalar_lea.vmem %s0, %s401
        $region60: #{tpu_custom_call.1} parent=55 // pred_fallthru
          _
      $region56: #{tpu_custom_call.1} parent=5 // pred_fallthru
        _
      %p403 = scmp.le.s32.totalorder 1, %s24
      %p404 = scmp.lt.s32.totalorder %s24, 6
      %p405 = pnand %p403, %p404
      %p406 = pneg %p405
      // Predicated region
      $region61: #{tpu_custom_call.1} parent=5 // pred_check
        _
      $region62: #{tpu_custom_call.1} parent=5 // pred_check_branch
        %408 = sbr.rel (%p405) target = $region64
      $region63: #{tpu_custom_call.1} parent=5 // pred_region
        %s409 = ssub.s32 %s24, 1
        // Predicated region
        $region65: #{tpu_custom_call.1} parent=63 // pred_check
          %p410 = pneg %p134
        $region66: #{tpu_custom_call.1} parent=63 // pred_check_branch
          %412 = sbr.rel (%p410) target = $region68
        $region67: #{tpu_custom_call.1} parent=63 // pred_region
          %413 = dma.done [#allocation7], 16
        $region68: #{tpu_custom_call.1} parent=63 // pred_fallthru
          _
        // Predicated region
        $region69: #{tpu_custom_call.1} parent=63 // pred_check
          %p414 = pneg %p176
        $region70: #{tpu_custom_call.1} parent=63 // pred_check_branch
          %416 = sbr.rel (%p414) target = $region72
        $region71: #{tpu_custom_call.1} parent=63 // pred_region
          %417 = dma.done [#allocation10], 16
        $region72: #{tpu_custom_call.1} parent=63 // pred_fallthru
          _
        // Predicated region
        $region73: #{tpu_custom_call.1} parent=63 // pred_check
          %p418 = pneg %p197
        $region74: #{tpu_custom_call.1} parent=63 // pred_check_branch
          %420 = sbr.rel (%p418) target = $region76
        $region75: #{tpu_custom_call.1} parent=63 // pred_region
          %421 = dma.done [#allocation10], 16
        $region76: #{tpu_custom_call.1} parent=63 // pred_fallthru
          _
        %p422 = scmp.lt.s32.totalorder %s29, 4
        %s423 = scalar_select %p422, %s29, 4
        %s424 = smul.addr %s423, 8
        %s425 = scalar_lea.vmem %s0, %s424
        %p426 = pneg %p50
        %p427 = pneg %p47
        %p428 = pneg %p71
        %p429 = pneg %p68
        %p430 = pneg %p92
        %p431 = pneg %p89
        %p432 = pneg %p113
        %p433 = pneg %p110
        %p434 = pneg %p134
        %p435 = pneg %p131
        %p436 = pneg %p155
        %p437 = pneg %p152
        %p438 = pneg %p176
        %p439 = pneg %p173
        %p440 = pneg %p197
        %p441 = pneg %p194
        %p442 = pneg %p218
        %p443 = pneg %p215
        %p444 = pneg %p239
        %p445 = pneg %p236
        %p446 = pneg %p260
        %p447 = pneg %p257
        %p448 = pneg %p281
        %p449 = pneg %p278
        %p450 = pneg %p302
        %p451 = pneg %p299
        %p452 = pneg %p323
        %p453 = pneg %p320
        %p454 = scmp.lt.s32.totalorder %s29, 4
        %s455 = scalar_select %p454, %s29, 4
        %s456 = smul.addr %s455, 8
        %s457 = scalar_lea.vmem %s0, %s456
        %p458 = scmp.eq.s32.totalorder %s29, 0
        // Predicated region
        $region77: #{tpu_custom_call.1} parent=63 // pred_check
          %p459 = pneg %p458
        $region78: #{tpu_custom_call.1} parent=63 // pred_check_branch
          %461 = sbr.rel (%p459) target = $region80
        $region79: #{tpu_custom_call.1} parent=63 // pred_region
          %vm462 = vcmask 261120
          %463 = vst.msk [vmem:[#allocation2] sm:$0xff] %vm462, 0.0
          %464 = vst.msk [vmem:[#allocation2 + $0x8] sm:$0xff] %vm462, 0.0
          %465 = vst.msk [vmem:[#allocation2 + $0x10] sm:$0xff] %vm462, 0.0
          %466 = vst.msk [vmem:[#allocation2 + $0x18] sm:$0xff] %vm462, 0.0
          %vm467 = vcmask 253952
          %468 = vst.msk [vmem:[#allocation3] sm:$0x1] %vm467, 0.0
          %vm469 = vcmask 0
          %470 = vst.msk [vmem:[#allocation4] sm:$0x1] %vm469, 0.0
          %471 = vst.msk [vmem:[#allocation5] sm:$0x1] %vm469, 0.0
        $region80: #{tpu_custom_call.1} parent=63 // pred_fallthru
          _
        %v472 = vld [vmem:[%s457] sm:$0xff]
        %v473 = vld [vmem:[%s1] sm:$0xff]
        %v474 = vld [vmem:[%s1 + $0x8] sm:$0xff]
        %v475 = vld [vmem:[%s1 + $0x10] sm:$0xff]
        %v476 = vld [vmem:[%s1 + $0x18] sm:$0xff]
        %v477 = vld [vmem:[%s2] sm:$0x1]
        %v479 = vlaneseq
        %v480 = vshrl.u32 %v479, 7
        %v481 = vsub.s32 0, %v480
        %v482 = vrot.slane %v477, %v481
        %vm484 = vcmask 261120
        %v486 = vsel %vm484, %v472, 0
        %488 = vmatprep.subr.mxu0 0.0
        %489 = vmatpush1.msra.mxu0 %v473
        %490 = vmatprep.subr.mxu0 0.0
        %491 = vmatpush1.msra.mxu0 %v474
        %492 = vmatprep.subr.mxu0 0.0
        %493 = vmatpush1.msra.mxu0 %v475
        %494 = vmatprep.subr.mxu0 0.0
        %495 = vmatpush1.msra.mxu0 %v476
        %496 = vmatprep.subr.mxu0 0.0
        %497 = vmatpush1.msra.mxu0 0.0
        %498 = vmatprep.subr.mxu0 0.0
        %499 = vmatpush1.msra.mxu0 0.0
        %500 = vmatprep.subr.mxu0 0.0
        %501 = vmatpush1.msra.mxu0 0.0
        %502 = vmatprep.subr.mxu0 0.0
        %503 = vmatpush1.msra.mxu0 0.0
        %504 = vmatprep.subr.mxu0 0.0
        %505 = vmatpush1.msra.mxu0 0.0
        %506 = vmatprep.subr.mxu0 0.0
        %507 = vmatpush1.msra.mxu0 0.0
        %508 = vmatprep.subr.mxu0 0.0
        %509 = vmatpush1.msra.mxu0 0.0
        %510 = vmatprep.subr.mxu0 0.0
        %511 = vmatpush1.msra.mxu0 0.0
        %512 = vmatprep.subr.mxu0 0.0
        %513 = vmatpush1.msra.mxu0 0.0
        %514 = vmatprep.subr.mxu0 0.0
        %515 = vmatpush1.msra.mxu0 0.0
        %516 = vmatprep.subr.mxu0 0.0
        %517 = vmatpush1.msra.mxu0 0.0
        %518 = vmatprep.subr.mxu0 0.0
        %519 = vmatpush1.msra.mxu0 0.0
        %520 = vmatprep.subr.mxu0 0.0
        %521 = vmatpush1.msra.mxu0 0.0
        %522 = vmatprep.subr.mxu0 0.0
        %523 = vmatpush1.msra.mxu0 0.0
        %524 = vmatprep.subr.mxu0 0.0
        %525 = vmatpush1.msra.mxu0 0.0
        %526 = vmatprep.subr.mxu0 0.0
        %527 = vmatpush1.msra.mxu0 0.0
        %528 = vmatprep.subr.mxu0 0.0
        %529 = vmatpush1.msra.mxu0 0.0
        %530 = vmatprep.subr.mxu0 0.0
        %531 = vmatpush1.msra.mxu0 0.0
        %532 = vmatprep.subr.mxu0 0.0
        %533 = vmatpush1.msra.mxu0 0.0
        %534 = vmatprep.subr.mxu0 0.0
        %535 = vmatpush1.msra.mxu0 0.0
        %536 = vmatprep.subr.mxu0 0.0
        %537 = vmatpush1.msra.mxu0 0.0
        %538 = vmatprep.subr.mxu0 0.0
        %539 = vmatpush1.msra.mxu0 0.0
        %540 = vmatprep.subr.mxu0 0.0
        %541 = vmatpush1.msra.mxu0 0.0
        %542 = vmatprep.subr.mxu0 0.0
        %543 = vmatpush1.msra.mxu0 0.0
        %544 = vmatprep.subr.mxu0 0.0
        %545 = vmatpush1.msra.mxu0 0.0
        %546 = vmatprep.subr.mxu0 0.0
        %547 = vmatpush1.msra.mxu0 0.0
        %548 = vmatprep.subr.mxu0 0.0
        %549 = vmatpush1.msra.mxu0 0.0
        %550 = vmatprep.subr.mxu0 0.0
        %551 = vmatpush1.msra.mxu0 0.0
        %552 = vmatprep.mubr.f32.mxu0 0.0
        %553 = vmatmul.mubr.f32.gmra.mrb[0].mxu0 %v486
        %v554 = vpop.f32.mrb[0].mxu0
        %v555 = vadd.f32 %v482, %v554
        %v556 = vpop.f32.mrb[0].mxu0
        %557 = vdwg.mxu0
        %v558 = vld [vmem:[%s3] sm:$0x1]
        %v559 = vld [vmem:[#allocation6] sm:$0x1]
        %v560 = vsel %vm484, %v555, 0.0
        %561 = vadd.xlane.f32.xlu0 %v560
        %v562 = vpop.xlane.xlu0 %561
        %v563 = vrcp.pop 32.0
        %v564 = vmul.f32 %v562, %v563
        %v565 = vsub.f32 %v555, %v564
        %v566 = vmul.f32 %v565, %v565
        %v567 = vsel %vm484, %v566, 0.0
        %568 = vadd.xlane.f32.xlu0 %v567
        %v569 = vpop.xlane.xlu0 %568
        %v570 = vmul.f32 %v569, %v563
        %v571 = vadd.f32 %v570, 1e-05
        %v572 = vrsqrt.pop %v571
        %v573 = vmul.f32 %v565, %v572
        %v575 = vlaneseq
        %v576 = vshrl.u32 %v575, 7
        %v577 = vsub.s32 0, %v576
        %v578 = vrot.slane %v558, %v577
        %v580 = vmul.f32 %v573, %v578
        %v582 = vlaneseq
        %v583 = vshrl.u32 %v582, 7
        %v584 = vsub.s32 0, %v583
        %v585 = vrot.slane %v559, %v584
        %v587 = vadd.f32 %v580, %v585
        %v588 = vmax.f32 %v587, 0.0
        %v589 = vld [vmem:[%s5] sm:$0xff]
        %v590 = vld [vmem:[%s5 + $0x8] sm:$0xff]
        %v591 = vld [vmem:[%s5 + $0x10] sm:$0xff]
        %v592 = vld [vmem:[%s5 + $0x18] sm:$0xff]
        %v593 = vld [vmem:[#allocation9] sm:$0x1]
        %v595 = vlaneseq
        %v596 = vshrl.u32 %v595, 7
        %v597 = vsub.s32 0, %v596
        %v598 = vrot.slane %v593, %v597
        %v601 = vsel %vm484, %v588, 0
        %603 = vmatprep.subr.mxu0 0.0
        %604 = vmatpush1.msra.mxu0 %v589
        %605 = vmatprep.subr.mxu0 0.0
        %606 = vmatpush1.msra.mxu0 %v590
        %607 = vmatprep.subr.mxu0 0.0
        %608 = vmatpush1.msra.mxu0 %v591
        %609 = vmatprep.subr.mxu0 0.0
        %610 = vmatpush1.msra.mxu0 %v592
        %611 = vmatprep.subr.mxu0 0.0
        %612 = vmatpush1.msra.mxu0 0.0
        %613 = vmatprep.subr.mxu0 0.0
        %614 = vmatpush1.msra.mxu0 0.0
        %615 = vmatprep.subr.mxu0 0.0
        %616 = vmatpush1.msra.mxu0 0.0
        %617 = vmatprep.subr.mxu0 0.0
        %618 = vmatpush1.msra.mxu0 0.0
        %619 = vmatprep.subr.mxu0 0.0
        %620 = vmatpush1.msra.mxu0 0.0
        %621 = vmatprep.subr.mxu0 0.0
        %622 = vmatpush1.msra.mxu0 0.0
        %623 = vmatprep.subr.mxu0 0.0
        %624 = vmatpush1.msra.mxu0 0.0
        %625 = vmatprep.subr.mxu0 0.0
        %626 = vmatpush1.msra.mxu0 0.0
        %627 = vmatprep.subr.mxu0 0.0
        %628 = vmatpush1.msra.mxu0 0.0
        %629 = vmatprep.subr.mxu0 0.0
        %630 = vmatpush1.msra.mxu0 0.0
        %631 = vmatprep.subr.mxu0 0.0
        %632 = vmatpush1.msra.mxu0 0.0
        %633 = vmatprep.subr.mxu0 0.0
        %634 = vmatpush1.msra.mxu0 0.0
        %635 = vmatprep.subr.mxu0 0.0
        %636 = vmatpush1.msra.mxu0 0.0
        %637 = vmatprep.subr.mxu0 0.0
        %638 = vmatpush1.msra.mxu0 0.0
        %639 = vmatprep.subr.mxu0 0.0
        %640 = vmatpush1.msra.mxu0 0.0
        %641 = vmatprep.subr.mxu0 0.0
        %642 = vmatpush1.msra.mxu0 0.0
        %643 = vmatprep.subr.mxu0 0.0
        %644 = vmatpush1.msra.mxu0 0.0
        %645 = vmatprep.subr.mxu0 0.0
        %646 = vmatpush1.msra.mxu0 0.0
        %647 = vmatprep.subr.mxu0 0.0
        %648 = vmatpush1.msra.mxu0 0.0
        %649 = vmatprep.subr.mxu0 0.0
        %650 = vmatpush1.msra.mxu0 0.0
        %651 = vmatprep.subr.mxu0 0.0
        %652 = vmatpush1.msra.mxu0 0.0
        %653 = vmatprep.subr.mxu0 0.0
        %654 = vmatpush1.msra.mxu0 0.0
        %655 = vmatprep.subr.mxu0 0.0
        %656 = vmatpush1.msra.mxu0 0.0
        %657 = vmatprep.subr.mxu0 0.0
        %658 = vmatpush1.msra.mxu0 0.0
        %659 = vmatprep.subr.mxu0 0.0
        %660 = vmatpush1.msra.mxu0 0.0
        %661 = vmatprep.subr.mxu0 0.0
        %662 = vmatpush1.msra.mxu0 0.0
        %663 = vmatprep.subr.mxu0 0.0
        %664 = vmatpush1.msra.mxu0 0.0
        %665 = vmatprep.subr.mxu0 0.0
        %666 = vmatpush1.msra.mxu0 0.0
        %667 = vmatprep.mubr.f32.mxu0 0.0
        %668 = vmatmul.mubr.f32.gmra.mrb[0].mxu0 %v601
        %v669 = vpop.f32.mrb[0].mxu0
        %v670 = vadd.f32 %v598, %v669
        %v671 = vpop.f32.mrb[0].mxu0
        %672 = vdwg.mxu0
        %v673 = vld [vmem:[#allocation11] sm:$0x1]
        %v674 = vld [vmem:[%s8] sm:$0x1]
        %v675 = vsel %vm484, %v670, 0.0
        %676 = vadd.xlane.f32.xlu0 %v675
        %v677 = vpop.xlane.xlu0 %676
        %v678 = vmul.f32 %v677, %v563
        %v679 = vsub.f32 %v670, %v678
        %v680 = vmul.f32 %v679, %v679
        %v681 = vsel %vm484, %v680, 0.0
        %682 = vadd.xlane.f32.xlu0 %v681
        %v683 = vpop.xlane.xlu0 %682
        %v684 = vmul.f32 %v683, %v563
        %v685 = vadd.f32 %v684, 1e-05
        %v686 = vrsqrt.pop %v685
        %v687 = vmul.f32 %v679, %v686
        %v689 = vlaneseq
        %v690 = vshrl.u32 %v689, 7
        %v691 = vsub.s32 0, %v690
        %v692 = vrot.slane %v673, %v691
        %v694 = vmul.f32 %v687, %v692
        %v696 = vlaneseq
        %v697 = vshrl.u32 %v696, 7
        %v698 = vsub.s32 0, %v697
        %v699 = vrot.slane %v674, %v698
        %v701 = vadd.f32 %v694, %v699
        %v702 = vmax.f32 %v701, 0.0
        %v703 = vld [vmem:[%s9] sm:$0xff]
        %v704 = vld [vmem:[%s9 + $0x8] sm:$0xff]
        %v705 = vld [vmem:[%s9 + $0x10] sm:$0xff]
        %v706 = vld [vmem:[%s9 + $0x18] sm:$0xff]
        %v707 = vld [vmem:[%s10] sm:$0x1]
        %v709 = vlaneseq
        %v710 = vshrl.u32 %v709, 7
        %v711 = vsub.s32 0, %v710
        %v712 = vrot.slane %v707, %v711
        %v715 = vsel %vm484, %v702, 0
        %717 = vmatprep.subr.mxu0 0.0
        %718 = vmatpush1.msra.mxu0 %v703
        %719 = vmatprep.subr.mxu0 0.0
        %720 = vmatpush1.msra.mxu0 %v704
        %721 = vmatprep.subr.mxu0 0.0
        %722 = vmatpush1.msra.mxu0 %v705
        %723 = vmatprep.subr.mxu0 0.0
        %724 = vmatpush1.msra.mxu0 %v706
        %725 = vmatprep.subr.mxu0 0.0
        %726 = vmatpush1.msra.mxu0 0.0
        %727 = vmatprep.subr.mxu0 0.0
        %728 = vmatpush1.msra.mxu0 0.0
        %729 = vmatprep.subr.mxu0 0.0
        %730 = vmatpush1.msra.mxu0 0.0
        %731 = vmatprep.subr.mxu0 0.0
        %732 = vmatpush1.msra.mxu0 0.0
        %733 = vmatprep.subr.mxu0 0.0
        %734 = vmatpush1.msra.mxu0 0.0
        %735 = vmatprep.subr.mxu0 0.0
        %736 = vmatpush1.msra.mxu0 0.0
        %737 = vmatprep.subr.mxu0 0.0
        %738 = vmatpush1.msra.mxu0 0.0
        %739 = vmatprep.subr.mxu0 0.0
        %740 = vmatpush1.msra.mxu0 0.0
        %741 = vmatprep.subr.mxu0 0.0
        %742 = vmatpush1.msra.mxu0 0.0
        %743 = vmatprep.subr.mxu0 0.0
        %744 = vmatpush1.msra.mxu0 0.0
        %745 = vmatprep.subr.mxu0 0.0
        %746 = vmatpush1.msra.mxu0 0.0
        %747 = vmatprep.subr.mxu0 0.0
        %748 = vmatpush1.msra.mxu0 0.0
        %749 = vmatprep.subr.mxu0 0.0
        %750 = vmatpush1.msra.mxu0 0.0
        %751 = vmatprep.subr.mxu0 0.0
        %752 = vmatpush1.msra.mxu0 0.0
        %753 = vmatprep.subr.mxu0 0.0
        %754 = vmatpush1.msra.mxu0 0.0
        %755 = vmatprep.subr.mxu0 0.0
        %756 = vmatpush1.msra.mxu0 0.0
        %757 = vmatprep.subr.mxu0 0.0
        %758 = vmatpush1.msra.mxu0 0.0
        %759 = vmatprep.subr.mxu0 0.0
        %760 = vmatpush1.msra.mxu0 0.0
        %761 = vmatprep.subr.mxu0 0.0
        %762 = vmatpush1.msra.mxu0 0.0
        %763 = vmatprep.subr.mxu0 0.0
        %764 = vmatpush1.msra.mxu0 0.0
        %765 = vmatprep.subr.mxu0 0.0
        %766 = vmatpush1.msra.mxu0 0.0
        %767 = vmatprep.subr.mxu0 0.0
        %768 = vmatpush1.msra.mxu0 0.0
        %769 = vmatprep.subr.mxu0 0.0
        %770 = vmatpush1.msra.mxu0 0.0
        %771 = vmatprep.subr.mxu0 0.0
        %772 = vmatpush1.msra.mxu0 0.0
        %773 = vmatprep.subr.mxu0 0.0
        %774 = vmatpush1.msra.mxu0 0.0
        %775 = vmatprep.subr.mxu0 0.0
        %776 = vmatpush1.msra.mxu0 0.0
        %777 = vmatprep.subr.mxu0 0.0
        %778 = vmatpush1.msra.mxu0 0.0
        %779 = vmatprep.subr.mxu0 0.0
        %780 = vmatpush1.msra.mxu0 0.0
        %781 = vmatprep.mubr.f32.mxu0 0.0
        %782 = vmatmul.mubr.f32.gmra.mrb[0].mxu0 %v715
        %v783 = vpop.f32.mrb[0].mxu0
        %v784 = vadd.f32 %v712, %v783
        %v785 = vpop.f32.mrb[0].mxu0
        %786 = vdwg.mxu0
        %s787 = smul.u32 %s29, 8
        %v788 = vlaneseq
        %v789 = vshrl.u32 %v788, 7
        %v790 = vstv %s787
        %v791 = vadd.s32 %v790, %v789
        %vm792 = vcmp.lt.s32.totalorder %v791, 35
        %v793 = vsel %vm792, 1, 0
        %v794 = vcvt.s32.f32 %v793
        %v795 = vmul.f32 %v784, %v794
        %v796 = vld [vmem:[#allocation2] sm:$0xff]
        %v797 = vld [vmem:[#allocation2 + $0x8] sm:$0xff]
        %v798 = vld [vmem:[#allocation2 + $0x10] sm:$0xff]
        %v799 = vld [vmem:[#allocation2 + $0x18] sm:$0xff]
        %800 = vxpose.xlu0.b32.start [1/16] %v795, 128
        %801 = vxpose.xlu0.b32.cont [2/16] 0.0, 128
        %802 = vxpose.xlu0.b32.cont [3/16] 0.0, 128
        %803 = vxpose.xlu0.b32.cont [4/16] 0.0, 128
        %804 = vxpose.xlu0.b32.cont [5/16] 0.0, 128
        %805 = vxpose.xlu0.b32.cont [6/16] 0.0, 128
        %806 = vxpose.xlu0.b32.cont [7/16] 0.0, 128
        %807 = vxpose.xlu0.b32.cont [8/16] 0.0, 128
        %808 = vxpose.xlu0.b32.cont [9/16] 0.0, 128
        %809 = vxpose.xlu0.b32.cont [10/16] 0.0, 128
        %810 = vxpose.xlu0.b32.cont [11/16] 0.0, 128
        %811 = vxpose.xlu0.b32.cont [12/16] 0.0, 128
        %812 = vxpose.xlu0.b32.cont [13/16] 0.0, 128
        %813 = vxpose.xlu0.b32.cont [14/16] 0.0, 128
        %814 = vxpose.xlu0.b32.cont [15/16] 0.0, 128
        %815 = vxpose.xlu0.b32.end [16/16] 0.0, 128
        %v816 = vpop.trf.xlu0
        %v817 = vpop.trf.xlu0
        %v818 = vpop.trf.xlu0
        %v819 = vpop.trf.xlu0
        %v820 = vpop.trf.xlu0
        %v821 = vpop.trf.xlu0
        %v822 = vpop.trf.xlu0
        %v823 = vpop.trf.xlu0
        %v824 = vpop.trf.xlu0
        %v825 = vpop.trf.xlu0
        %v826 = vpop.trf.xlu0
        %v827 = vpop.trf.xlu0
        %v828 = vpop.trf.xlu0
        %v829 = vpop.trf.xlu0
        %v830 = vpop.trf.xlu0
        %v831 = vpop.trf.xlu0
        %vm832 = vcmask 64512
        %v834 = vsel %vm832, %v816, 0
        %v837 = vsel %vm832, %v817, 0
        %v840 = vsel %vm832, %v818, 0
        %v843 = vsel %vm832, %v819, 0
        %845 = vmatprep.subr.mxu0 0.0
        %846 = vmatpush1.msra.mxu0 %v795
        %847 = vmatprep.subr.mxu0 0.0
        %848 = vmatpush1.msra.mxu0 0.0
        %849 = vmatprep.subr.mxu0 0.0
        %850 = vmatpush1.msra.mxu0 0.0
        %851 = vmatprep.subr.mxu0 0.0
        %852 = vmatpush1.msra.mxu0 0.0
        %853 = vmatprep.subr.mxu0 0.0
        %854 = vmatpush1.msra.mxu0 0.0
        %855 = vmatprep.subr.mxu0 0.0
        %856 = vmatpush1.msra.mxu0 0.0
        %857 = vmatprep.subr.mxu0 0.0
        %858 = vmatpush1.msra.mxu0 0.0
        %859 = vmatprep.subr.mxu0 0.0
        %860 = vmatpush1.msra.mxu0 0.0
        %861 = vmatprep.subr.mxu0 0.0
        %862 = vmatpush1.msra.mxu0 0.0
        %863 = vmatprep.subr.mxu0 0.0
        %864 = vmatpush1.msra.mxu0 0.0
        %865 = vmatprep.subr.mxu0 0.0
        %866 = vmatpush1.msra.mxu0 0.0
        %867 = vmatprep.subr.mxu0 0.0
        %868 = vmatpush1.msra.mxu0 0.0
        %869 = vmatprep.subr.mxu0 0.0
        %870 = vmatpush1.msra.mxu0 0.0
        %871 = vmatprep.subr.mxu0 0.0
        %872 = vmatpush1.msra.mxu0 0.0
        %873 = vmatprep.subr.mxu0 0.0
        %874 = vmatpush1.msra.mxu0 0.0
        %875 = vmatprep.subr.mxu0 0.0
        %876 = vmatpush1.msra.mxu0 0.0
        %877 = vmatprep.subr.mxu0 0.0
        %878 = vmatpush1.msra.mxu0 0.0
        %879 = vmatprep.subr.mxu0 0.0
        %880 = vmatpush1.msra.mxu0 0.0
        %881 = vmatprep.subr.mxu0 0.0
        %882 = vmatpush1.msra.mxu0 0.0
        %883 = vmatprep.subr.mxu0 0.0
        %884 = vmatpush1.msra.mxu0 0.0
        %885 = vmatprep.subr.mxu0 0.0
        %886 = vmatpush1.msra.mxu0 0.0
        %887 = vmatprep.subr.mxu0 0.0
        %888 = vmatpush1.msra.mxu0 0.0
        %889 = vmatprep.subr.mxu0 0.0
        %890 = vmatpush1.msra.mxu0 0.0
        %891 = vmatprep.subr.mxu0 0.0
        %892 = vmatpush1.msra.mxu0 0.0
        %893 = vmatprep.subr.mxu0 0.0
        %894 = vmatpush1.msra.mxu0 0.0
        %895 = vmatprep.subr.mxu0 0.0
        %896 = vmatpush1.msra.mxu0 0.0
        %897 = vmatprep.subr.mxu0 0.0
        %898 = vmatpush1.msra.mxu0 0.0
        %899 = vmatprep.subr.mxu0 0.0
        %900 = vmatpush1.msra.mxu0 0.0
        %901 = vmatprep.subr.mxu0 0.0
        %902 = vmatpush1.msra.mxu0 0.0
        %903 = vmatprep.subr.mxu0 0.0
        %904 = vmatpush1.msra.mxu0 0.0
        %905 = vmatprep.subr.mxu0 0.0
        %906 = vmatpush1.msra.mxu0 0.0
        %907 = vmatprep.subr.mxu0 0.0
        %908 = vmatpush1.msra.mxu0 0.0
        %909 = vmatprep.mubr.f32.mxu0 0.0
        %910 = vmatmul.mubr.f32.gmra.mrb[0].mxu0 %v834
        %v911 = vpop.f32.mrb[0].mxu0
        %v912 = vadd.f32 0.0, %v911
        %v913 = vpop.f32.mrb[0].mxu0
        %914 = vmatprep.mubr.f32.mxu0 0.0
        %915 = vmatmul.mubr.f32.gmra.mrb[0].mxu0 %v837
        %v916 = vpop.f32.mrb[0].mxu0
        %v917 = vadd.f32 0.0, %v916
        %v918 = vpop.f32.mrb[0].mxu0
        %919 = vmatprep.mubr.f32.mxu0 0.0
        %920 = vmatmul.mubr.f32.gmra.mrb[0].mxu0 %v840
        %v921 = vpop.f32.mrb[0].mxu0
        %v922 = vadd.f32 0.0, %v921
        %v923 = vpop.f32.mrb[0].mxu0
        %924 = vmatprep.mubr.f32.mxu0 0.0
        %925 = vmatmul.mubr.f32.gmra.mrb[0].mxu0 %v843
        %v926 = vpop.f32.mrb[0].mxu0
        %v927 = vadd.f32 0.0, %v926
        %v928 = vpop.f32.mrb[0].mxu0
        %929 = vdwg.mxu0
        %v930 = vadd.f32 %v796, %v912
        %v931 = vadd.f32 %v797, %v917
        %v932 = vadd.f32 %v798, %v922
        %v933 = vadd.f32 %v799, %v927
        %934 = vst.msk [vmem:[#allocation2] sm:$0xff] %vm484, %v930
        %935 = vst.msk [vmem:[#allocation2 + $0x8] sm:$0xff] %vm484, %v931
        %936 = vst.msk [vmem:[#allocation2 + $0x10] sm:$0xff] %vm484, %v932
        %937 = vst.msk [vmem:[#allocation2 + $0x18] sm:$0xff] %vm484, %v933
        %v938 = vld [vmem:[#allocation3] sm:$0x1]
        %v939 = vsel %vm484, %v795, 0.0
        %v940 = vrot.slane %v939, 4
        %v941 = vadd.f32 %v939, %v940
        %v942 = vrot.slane %v941, 2
        %v943 = vadd.f32 %v941, %v942
        %v944 = vrot.slane %v943, 1
        %v945 = vadd.f32 %v943, %v944
        %v946 = vadd.f32 %v938, %v945
        %vm947 = vcmask 253952
        %948 = vst.msk [vmem:[#allocation3] sm:$0x1] %vm947, %v946
        %v949 = vmul.f32 %v795, %v795
        %v950 = vsel %vm484, %v949, 0.0
        %951 = vadd.xlane.f32.xlu0 %v950
        %v952 = vpop.xlane.xlu0 %951
        %v953 = vrsqrt.pop %v952
        %v954 = vmul.f32 %v952, %v953
        %vm955 = vcmp.eq.f32.partialorder %v952, inf
        %v956 = vsel %vm955, %v952, %v954
        %vm957 = vcmp.eq.f32.partialorder %v952, 0.0
        %v958 = vand.u32 %v952, 2147483648
        %v959 = vsel %vm957, %v958, %v956
        %v960 = vmul.f32 %v472, %v472
        %v961 = vsel %vm484, %v960, 0.0
        %962 = vadd.xlane.f32.xlu0 %v961
        %v963 = vpop.xlane.xlu0 %962
        %v964 = vrsqrt.pop %v963
        %v965 = vmul.f32 %v963, %v964
        %vm966 = vcmp.eq.f32.partialorder %v963, inf
        %v967 = vsel %vm966, %v963, %v965
        %vm968 = vcmp.eq.f32.partialorder %v963, 0.0
        %v969 = vand.u32 %v963, 2147483648
        %v970 = vsel %vm968, %v969, %v967
        %v971 = vmul.f32 %v970, %v794
        %v972 = vld [vmem:[#allocation4] sm:$0x1]
        %v973 = vadd.f32 %v959, 0.0
        %v974 = vrot.slane %v973, 4
        %v975 = vadd.f32 %v973, %v974
        %v976 = vrot.slane %v975, 2
        %v977 = vadd.f32 %v975, %v976
        %v978 = vrot.slane %v977, 1
        %v979 = vadd.f32 %v977, %v978
        %v980 = vadd.f32 %v972, %v979
        %vm981 = vcmask 0
        %982 = vst.msk [vmem:[#allocation4] sm:$0x1] %vm981, %v980
        %v983 = vld [vmem:[#allocation5] sm:$0x1]
        %v984 = vadd.f32 %v971, 0.0
        %v985 = vrot.slane %v984, 4
        %v986 = vadd.f32 %v984, %v985
        %v987 = vrot.slane %v986, 2
        %v988 = vadd.f32 %v986, %v987
        %v989 = vrot.slane %v988, 1
        %v990 = vadd.f32 %v988, %v989
        %v991 = vadd.f32 %v983, %v990
        %992 = vst.msk [vmem:[#allocation5] sm:$0x1] %vm981, %v991
        %p993 = scmp.eq.s32.totalorder %s29, 4
        // Predicated region
        $region81: #{tpu_custom_call.1} parent=63 // pred_check
          %p994 = pneg %p993
        $region82: #{tpu_custom_call.1} parent=63 // pred_check_branch
          %996 = sbr.rel (%p994) target = $region84
        $region83: #{tpu_custom_call.1} parent=63 // pred_region
          %v997 = vld [vmem:[#allocation2] sm:$0xff]
          %v998 = vld [vmem:[#allocation2 + $0x8] sm:$0xff]
          %v999 = vld [vmem:[#allocation2 + $0x10] sm:$0xff]
          %v1000 = vld [vmem:[#allocation2 + $0x18] sm:$0xff]
          %v1001 = vld [vmem:[#allocation3] sm:$0x1]
          %1002 = vxpose.xlu0.b32.start [1/16] %v1001, 128
          %1003 = vxpose.xlu0.b32.cont [2/16] 0.0, 128
          %1004 = vxpose.xlu0.b32.cont [3/16] 0.0, 128
          %1005 = vxpose.xlu0.b32.cont [4/16] 0.0, 128
          %1006 = vxpose.xlu0.b32.cont [5/16] 0.0, 128
          %1007 = vxpose.xlu0.b32.cont [6/16] 0.0, 128
          %1008 = vxpose.xlu0.b32.cont [7/16] 0.0, 128
          %1009 = vxpose.xlu0.b32.cont [8/16] 0.0, 128
          %1010 = vxpose.xlu0.b32.cont [9/16] 0.0, 128
          %1011 = vxpose.xlu0.b32.cont [10/16] 0.0, 128
          %1012 = vxpose.xlu0.b32.cont [11/16] 0.0, 128
          %1013 = vxpose.xlu0.b32.cont [12/16] 0.0, 128
          %1014 = vxpose.xlu0.b32.cont [13/16] 0.0, 128
          %1015 = vxpose.xlu0.b32.cont [14/16] 0.0, 128
          %1016 = vxpose.xlu0.b32.cont [15/16] 0.0, 128
          %1017 = vxpose.xlu0.b32.end [16/16] 0.0, 128
          %v1018 = vpop.trf.xlu0
          %v1019 = vpop.trf.xlu0
          %v1020 = vpop.trf.xlu0
          %v1021 = vpop.trf.xlu0
          %v1022 = vpop.trf.xlu0
          %v1023 = vpop.trf.xlu0
          %v1024 = vpop.trf.xlu0
          %v1025 = vpop.trf.xlu0
          %v1026 = vpop.trf.xlu0
          %v1027 = vpop.trf.xlu0
          %v1028 = vpop.trf.xlu0
          %v1029 = vpop.trf.xlu0
          %v1030 = vpop.trf.xlu0
          %v1031 = vpop.trf.xlu0
          %v1032 = vpop.trf.xlu0
          %v1033 = vpop.trf.xlu0
          %vm1034 = vcmask 7168
          %v1036 = vsel %vm1034, %v1018, 0
          %v1039 = vsel %vm1034, %v1019, 0
          %v1042 = vsel %vm1034, %v1020, 0
          %v1045 = vsel %vm1034, %v1021, 0
          %vm1047 = vcmask 1040384
          %v1049 = vsel %vm1047, %v1001, 0
          %1051 = vmatprep.subr.mxu0 0.0
          %1052 = vmatpush1.msra.mxu0 %v1049
          %1053 = vmatprep.subr.mxu0 0.0
          %1054 = vmatpush1.msra.mxu0 0.0
          %1055 = vmatprep.subr.mxu0 0.0
          %1056 = vmatpush1.msra.mxu0 0.0
          %1057 = vmatprep.subr.mxu0 0.0
          %1058 = vmatpush1.msra.mxu0 0.0
          %1059 = vmatprep.subr.mxu0 0.0
          %1060 = vmatpush1.msra.mxu0 0.0
          %1061 = vmatprep.subr.mxu0 0.0
          %1062 = vmatpush1.msra.mxu0 0.0
          %1063 = vmatprep.subr.mxu0 0.0
          %1064 = vmatpush1.msra.mxu0 0.0
          %1065 = vmatprep.subr.mxu0 0.0
          %1066 = vmatpush1.msra.mxu0 0.0
          %1067 = vmatprep.subr.mxu0 0.0
          %1068 = vmatpush1.msra.mxu0 0.0
          %1069 = vmatprep.subr.mxu0 0.0
          %1070 = vmatpush1.msra.mxu0 0.0
          %1071 = vmatprep.subr.mxu0 0.0
          %1072 = vmatpush1.msra.mxu0 0.0
          %1073 = vmatprep.subr.mxu0 0.0
          %1074 = vmatpush1.msra.mxu0 0.0
          %1075 = vmatprep.subr.mxu0 0.0
          %1076 = vmatpush1.msra.mxu0 0.0
          %1077 = vmatprep.subr.mxu0 0.0
          %1078 = vmatpush1.msra.mxu0 0.0
          %1079 = vmatprep.subr.mxu0 0.0
          %1080 = vmatpush1.msra.mxu0 0.0
          %1081 = vmatprep.subr.mxu0 0.0
          %1082 = vmatpush1.msra.mxu0 0.0
          %1083 = vmatprep.subr.mxu0 0.0
          %1084 = vmatpush1.msra.mxu0 0.0
          %1085 = vmatprep.subr.mxu0 0.0
          %1086 = vmatpush1.msra.mxu0 0.0
          %1087 = vmatprep.subr.mxu0 0.0
          %1088 = vmatpush1.msra.mxu0 0.0
          %1089 = vmatprep.subr.mxu0 0.0
          %1090 = vmatpush1.msra.mxu0 0.0
          %1091 = vmatprep.subr.mxu0 0.0
          %1092 = vmatpush1.msra.mxu0 0.0
          %1093 = vmatprep.subr.mxu0 0.0
          %1094 = vmatpush1.msra.mxu0 0.0
          %1095 = vmatprep.subr.mxu0 0.0
          %1096 = vmatpush1.msra.mxu0 0.0
          %1097 = vmatprep.subr.mxu0 0.0
          %1098 = vmatpush1.msra.mxu0 0.0
          %1099 = vmatprep.subr.mxu0 0.0
          %1100 = vmatpush1.msra.mxu0 0.0
          %1101 = vmatprep.subr.mxu0 0.0
          %1102 = vmatpush1.msra.mxu0 0.0
          %1103 = vmatprep.subr.mxu0 0.0
          %1104 = vmatpush1.msra.mxu0 0.0
          %1105 = vmatprep.subr.mxu0 0.0
          %1106 = vmatpush1.msra.mxu0 0.0
          %1107 = vmatprep.subr.mxu0 0.0
          %1108 = vmatpush1.msra.mxu0 0.0
          %1109 = vmatprep.subr.mxu0 0.0
          %1110 = vmatpush1.msra.mxu0 0.0
          %1111 = vmatprep.subr.mxu0 0.0
          %1112 = vmatpush1.msra.mxu0 0.0
          %1113 = vmatprep.subr.mxu0 0.0
          %1114 = vmatpush1.msra.mxu0 0.0
          %1115 = vmatprep.mubr.f32.mxu0 0.0
          %1116 = vmatmul.mubr.f32.gmra.mrb[0].mxu0 %v1036
          %v1117 = vpop.f32.mrb[0].mxu0
          %v1118 = vadd.f32 0.0, %v1117
          %v1119 = vpop.f32.mrb[0].mxu0
          %1120 = vmatprep.mubr.f32.mxu0 0.0
          %1121 = vmatmul.mubr.f32.gmra.mrb[0].mxu0 %v1039
          %v1122 = vpop.f32.mrb[0].mxu0
          %v1123 = vadd.f32 0.0, %v1122
          %v1124 = vpop.f32.mrb[0].mxu0
          %1125 = vmatprep.mubr.f32.mxu0 0.0
          %1126 = vmatmul.mubr.f32.gmra.mrb[0].mxu0 %v1042
          %v1127 = vpop.f32.mrb[0].mxu0
          %v1128 = vadd.f32 0.0, %v1127
          %v1129 = vpop.f32.mrb[0].mxu0
          %1130 = vmatprep.mubr.f32.mxu0 0.0
          %1131 = vmatmul.mubr.f32.gmra.mrb[0].mxu0 %v1045
          %v1132 = vpop.f32.mrb[0].mxu0
          %v1133 = vadd.f32 0.0, %v1132
          %v1134 = vpop.f32.mrb[0].mxu0
          %1135 = vdwg.mxu0
          %v1136 = vmul.f32 %v1118, 0.028571429
          %v1137 = vmul.f32 %v1123, 0.028571429
          %v1138 = vmul.f32 %v1128, 0.028571429
          %v1139 = vmul.f32 %v1133, 0.028571429
          %v1140 = vsub.f32 %v997, %v1136
          %v1141 = vsub.f32 %v998, %v1137
          %v1142 = vsub.f32 %v999, %v1138
          %v1143 = vsub.f32 %v1000, %v1139
          %v1144 = vmul.f32 %v1140, 0.029411765
          %v1145 = vmul.f32 %v1141, 0.029411765
          %v1146 = vmul.f32 %v1142, 0.029411765
          %v1147 = vmul.f32 %v1143, 0.029411765
          %v1148 = vadd.s32 %v789, 8
          %v1149 = vadd.s32 %v789, 16
          %v1150 = vadd.s32 %v789, 24
          %v1151 = vlaneseq
          %v1152 = vand.u32 %v1151, 127
          %vm1153 = vcmp.eq.s32.totalorder %v789, %v1152
          %vm1154 = vcmp.eq.s32.totalorder %v1148, %v1152
          %vm1155 = vcmp.eq.s32.totalorder %v1149, %v1152
          %vm1156 = vcmp.eq.s32.totalorder %v1150, %v1152
          %v1157 = vsel %vm1153, %v1144, 0.0
          %v1158 = vsel %vm1154, %v1145, 0.0
          %v1159 = vsel %vm1155, %v1146, 0.0
          %v1160 = vsel %vm1156, %v1147, 0.0
          %v1161 = vsel %vm484, %v1157, 0.0
          %v1162 = vsel %vm484, %v1158, 0.0
          %v1163 = vadd.f32 %v1161, %v1162
          %v1164 = vsel %vm484, %v1159, 0.0
          %v1165 = vadd.f32 %v1163, %v1164
          %v1166 = vsel %vm484, %v1160, 0.0
          %v1167 = vadd.f32 %v1165, %v1166
          %v1168 = vrot.slane %v1167, 4
          %v1169 = vadd.f32 %v1167, %v1168
          %v1170 = vrot.slane %v1169, 2
          %v1171 = vadd.f32 %v1169, %v1170
          %v1172 = vrot.slane %v1171, 1
          %v1173 = vadd.f32 %v1171, %v1172
          %v1174 = vadd.f32 %v1173, 0.0001
          %v1175 = vrsqrt.pop %v1174
          %v1176 = vmul.f32 %v1174, %v1175
          %vm1177 = vcmp.eq.f32.partialorder %v1174, inf
          %v1178 = vsel %vm1177, %v1174, %v1176
          %vm1179 = vcmp.eq.f32.partialorder %v1174, 0.0
          %v1180 = vand.u32 %v1174, 2147483648
          %v1181 = vsel %vm1179, %v1180, %v1178
          %v1182 = vsub.f32 1.0, %v1181
          %v1183 = vmax.f32 %v1182, 0.0
          %v1184 = vsel %vm484, %v1183, 0.0
          %1185 = vadd.xlane.f32.xlu0 %v1184
          %v1186 = vpop.xlane.xlu0 %1185
          %v1187 = vmul.f32 %v1186, %v563
          %v1188 = vsel %vm1153, 0.0, %v1144
          %v1189 = vsel %vm1154, 0.0, %v1145
          %v1190 = vsel %vm1155, 0.0, %v1146
          %v1191 = vsel %vm1156, 0.0, %v1147
          %v1192 = vmul.f32 %v1188, %v1188
          %v1193 = vmul.f32 %v1189, %v1189
          %v1194 = vmul.f32 %v1190, %v1190
          %v1195 = vmul.f32 %v1191, %v1191
          %v1196 = vsel %vm484, %v1192, 0.0
          %1197 = vadd.xlane.f32.xlu0 %v1196
          %v1198 = vpop.xlane.xlu0 %1197
          %v1199 = vsel %vm484, %v1193, 0.0
          %1200 = vadd.xlane.f32.xlu0 %v1199
          %v1201 = vpop.xlane.xlu0 %1200
          %v1202 = vsel %vm484, %v1194, 0.0
          %1203 = vadd.xlane.f32.xlu0 %v1202
          %v1204 = vpop.xlane.xlu0 %1203
          %v1205 = vsel %vm484, %v1195, 0.0
          %1206 = vadd.xlane.f32.xlu0 %v1205
          %v1207 = vpop.xlane.xlu0 %1206
          %v1208 = vadd.f32 %v1198, %v1201
          %v1209 = vadd.f32 %v1208, %v1204
          %v1210 = vadd.f32 %v1209, %v1207
          %v1211 = vrot.slane %v1210, 4
          %v1212 = vadd.f32 %v1210, %v1211
          %v1213 = vrot.slane %v1212, 2
          %v1214 = vadd.f32 %v1212, %v1213
          %v1215 = vrot.slane %v1214, 1
          %v1216 = vadd.f32 %v1214, %v1215
          %v1217 = vmul.f32 %v1216, 0.03125
          %v1218 = vmul.f32 %v1001, 0.028571429
          %v1219 = vsel %vm947, %v1218, 0.0
          %1220 = vadd.xlane.f32.xlu0 %v1219
          %v1221 = vpop.xlane.xlu0 %1220
          %v1222 = vadd.f32 %v1221, 0.0
          %v1223 = vmul.f32 %v1222, 0.03125
          %vm1224 = vcmp.eq.s32.totalorder %v1152, 0
          %v1225 = vsel %vm1224, %v1187, 0.0
          %vm1226 = vcmp.eq.s32.totalorder %v1152, 1
          %v1227 = vsel %vm1226, %v1217, 0.0
          %v1228 = vadd.f32 %v1225, %v1227
          %vm1229 = vcmp.eq.s32.totalorder %v1152, 2
          %v1230 = vsel %vm1229, %v1223, 0.0
          %v1231 = vadd.f32 %v1228, %v1230
          %v1232 = vld [vmem:[#allocation4] sm:$0x1]
          %v1233 = vmul.f32 %v1232, 0.028571429
          %v1234 = vld [vmem:[#allocation5] sm:$0x1]
          %v1235 = vmul.f32 %v1234, 0.028571429
          %vm1236 = vcmp.eq.s32.totalorder %v1152, 3
          %1238 = vset.pattern.permute.xlu0 0
          %1239 = vperm.xlu0 %1238, %v1233
          %v1240 = vpop.permute.xlu0 %1239
          %v1242 = vlaneseq
          %v1243 = vshrl.u32 %v1242, 7
          %v1244 = vsub.s32 0, %v1243
          %v1245 = vrot.slane %v1240, %v1244
          %v1246 = vsel %vm1236, %v1245, 0.0
          %v1247 = vadd.f32 %v1231, %v1246
          %vm1248 = vcmp.eq.s32.totalorder %v1152, 4
          %1250 = vset.pattern.permute.xlu0 0
          %1251 = vperm.xlu0 %1250, %v1235
          %v1252 = vpop.permute.xlu0 %1251
          %v1254 = vlaneseq
          %v1255 = vshrl.u32 %v1254, 7
          %v1256 = vsub.s32 0, %v1255
          %v1257 = vrot.slane %v1252, %v1256
          %v1258 = vsel %vm1248, %v1257, 0.0
          %v1259 = vadd.f32 %v1247, %v1258
          %vm1260 = vcmp.eq.s32.totalorder %v1152, 5
          %v1261 = vsub.f32 %v1233, %v1235
          %1263 = vset.pattern.permute.xlu0 0
          %1264 = vperm.xlu0 %1263, %v1261
          %v1265 = vpop.permute.xlu0 %1264
          %v1267 = vlaneseq
          %v1268 = vshrl.u32 %v1267, 7
          %v1269 = vsub.s32 0, %v1268
          %v1270 = vrot.slane %v1265, %v1269
          %v1271 = vsel %vm1260, %v1270, 0.0
          %v1272 = vadd.f32 %v1259, %v1271
          %1273 = vst.msk [vmem:[#allocation12] sm:$0xff] %vm484, %v1144
          %1274 = vst.msk [vmem:[#allocation12 + $0x8] sm:$0xff] %vm484, %v1145
          %1275 = vst.msk [vmem:[#allocation12 + $0x10] sm:$0xff] %vm484, %v1146
          %1276 = vst.msk [vmem:[#allocation12 + $0x18] sm:$0xff] %vm484, %v1147
          %1277 = vst.msk [vmem:[#allocation13] sm:$0x1] %vm947, %v1181
          %1278 = vst [vmem:[#allocation15] sm:$0x1] %v1272
        $region84: #{tpu_custom_call.1} parent=63 // pred_fallthru
          _
        // Predicated region
        $region85: #{tpu_custom_call.1} parent=63 // pred_check
          %p1279 = pneg %p278
        $region86: #{tpu_custom_call.1} parent=63 // pred_check_branch
          %1281 = sbr.rel (%p1279) target = $region88
        $region87: #{tpu_custom_call.1} parent=63 // pred_region
          %s1283 = ssub.s32 512, 512
          %1284 = vsyncadd [#allocation8], %s1283
          %s1285 = sshll.u32 [#allocation12], 4
          %s1286 = int_to_ptr.vmem [resolvable:$true] %s1285
          %1291 = dma.vmem_to_hbm [thread:$0]  %s1286, 512, %s11, [#allocation8], 128, 128, 8
        $region88: #{tpu_custom_call.1} parent=63 // pred_fallthru
          _
        // Predicated region
        $region89: #{tpu_custom_call.1} parent=63 // pred_check
          %p1292 = pneg %p299
        $region90: #{tpu_custom_call.1} parent=63 // pred_check_branch
          %1294 = sbr.rel (%p1292) target = $region92
        $region91: #{tpu_custom_call.1} parent=63 // pred_region
          %s1296 = ssub.s32 16, 16
          %1297 = vsyncadd [#allocation14], %s1296
          %s1299 = sshll.u32 [#allocation13], 4
          %s1300 = int_to_ptr.vmem [resolvable:$true] %s1299
          %1302 = dma.vmem_to_hbm [thread:$0]  %s1300, 16, %s12, [#allocation14]
        $region92: #{tpu_custom_call.1} parent=63 // pred_fallthru
          _
        // Predicated region
        $region93: #{tpu_custom_call.1} parent=63 // pred_check
          %p1303 = pneg %p320
        $region94: #{tpu_custom_call.1} parent=63 // pred_check_branch
          %1305 = sbr.rel (%p1303) target = $region96
        $region95: #{tpu_custom_call.1} parent=63 // pred_region
          %s1307 = ssub.s32 16, 16
          %1308 = vsyncadd [#allocation14], %s1307
          %s1310 = sshll.u32 [#allocation15], 4
          %s1311 = int_to_ptr.vmem [resolvable:$true] %s1310
          %1313 = dma.vmem_to_hbm [thread:$0]  %s1311, 16, %s13, [#allocation14]
        $region96: #{tpu_custom_call.1} parent=63 // pred_fallthru
          _
        // Predicated region
        $region97: #{tpu_custom_call.1} parent=63 // pred_check
          %p1314 = pneg %p278
        $region98: #{tpu_custom_call.1} parent=63 // pred_check_branch
          %1316 = sbr.rel (%p1314) target = $region100
        $region99: #{tpu_custom_call.1} parent=63 // pred_region
          %1317 = dma.done [#allocation8], 512
        $region100: #{tpu_custom_call.1} parent=63 // pred_fallthru
          _
        // Predicated region
        $region101: #{tpu_custom_call.1} parent=63 // pred_check
          %p1318 = pneg %p299
        $region102: #{tpu_custom_call.1} parent=63 // pred_check_branch
          %1320 = sbr.rel (%p1318) target = $region104
        $region103: #{tpu_custom_call.1} parent=63 // pred_region
          %1321 = dma.done [#allocation14], 16
        $region104: #{tpu_custom_call.1} parent=63 // pred_fallthru
          _
        // Predicated region
        $region105: #{tpu_custom_call.1} parent=63 // pred_check
          %p1322 = pneg %p320
        $region106: #{tpu_custom_call.1} parent=63 // pred_check_branch
          %1324 = sbr.rel (%p1322) target = $region108
        $region107: #{tpu_custom_call.1} parent=63 // pred_region
          %1325 = dma.done [#allocation14], 16
        $region108: #{tpu_custom_call.1} parent=63 // pred_fallthru
          _
      $region64: #{tpu_custom_call.1} parent=5 // pred_fallthru
        _
      %p1326 = scmp.le.s32.totalorder 2, %s24
      // Predicated region
      $region109: #{tpu_custom_call.1} parent=5 // pred_check
        %p1327 = pneg %p1326
      $region110: #{tpu_custom_call.1} parent=5 // pred_check_branch
        %1329 = sbr.rel (%p1327) target = $region112
      $region111: #{tpu_custom_call.1} parent=5 // pred_region
        %s1330 = ssub.s32 %s24, 2
      $region112: #{tpu_custom_call.1} parent=5 // pred_fallthru
        _
    $region6: #{tpu_custom_call.1} parent=1 // loop_footer
      %s28 = sadd.s32 1, %s24
    $region7: #{tpu_custom_call.1} parent=1 // loop_footer_branch
      %23 = sbr.rel target = $region3
    $region8: #{tpu_custom_call.1} parent=1 // loop_exit
      _
    %1331 = vsyncpa [#allocation7], 1
    %s1332 = scalar_lea.sflag [#allocation7], 1
    %1333 = vsyncpa %s1332, 1
    %1334 = vsyncpa [#allocation10], 1
    %1335 = vsyncpa [#allocation8], 1
    %s1336 = scalar_lea.sflag [#allocation8], 1
    %1337 = vsyncpa %s1336, 1
    %1338 = vsyncpa [#allocation14], 1

</llo_original>
